<compile_context>
chip_gen: v7x
topology: tpu7x:2x2x1
jax: 0.10.0
libtpu: 0.0.40
codegen_flags: <defaults>
</compile_context>

<pallas_src>
import math

import jax
import jax.numpy as jnp
from jax.experimental import pallas as pl
from jax.experimental.pallas import tpu as pltpu


def _round_up(v, m):
    return ((v + m - 1) // m) * m


def _make_gs_kernel(tk, x_col_resident, rowsum_col):
    """Build the kernel body.

    tk             : reduction tile width (static).
    x_col_resident : if True, x_col_ref holds the full (n_col_pad, f_pad) array
                     and is sliced per reduction step; else it is a (tk, f_pad)
                     streamed tile.
    rowsum_col     : if not None, column index of the ones-column in x_col so
                     that acc[:, rowsum_col] == rowsum(adj) (MXU-folded rowsum);
                     if None, an explicit (tm, 1) rowsum scratch is used.
    """

    def kernel(x_row_ref, x_col_ref, adj_ref, w1_ref, w2_ref, out_ref,
               acc_ref, *scratch):
        rowsum_ref = None if rowsum_col is not None else scratch[0]
        k = pl.program_id(1)

        @pl.when(k == 0)
        def _init():
            acc_ref[...] = jnp.zeros_like(acc_ref)
            if rowsum_ref is not None:
                rowsum_ref[...] = jnp.zeros_like(rowsum_ref)

        # bf16 adjacency tile -> exact f32 (entries are 0/1).
        adj_blk = adj_ref[...].astype(jnp.float32)                 # (TM, TK)

        if x_col_resident:
            start = pl.multiple_of(k * tk, tk)
            x_blk = x_col_ref[pl.ds(start, tk), :]                 # (TK, F)
        else:
            x_blk = x_col_ref[...]                                 # (TK, F)

        # Accumulate adj @ x on the MXU with an f32 VMEM accumulator.
        acc_ref[...] += jnp.dot(adj_blk, x_blk,
                                preferred_element_type=jnp.float32)
        if rowsum_ref is not None:
            # Explicit per-row adjacency sum (XLU cross-lane reduce).
            rowsum_ref[...] += jnp.sum(adj_blk, axis=1, keepdims=True)

        @pl.when(k == pl.num_programs(1) - 1)
        def _finalize():
            x_row = x_row_ref[...]                                 # (TM, F)
            acc = acc_ref[...]                                     # (TM, F)
            if rowsum_col is not None:
                rowsum = acc[:, rowsum_col:rowsum_col + 1]         # MXU-folded
            else:
                rowsum = rowsum_ref[...]
            # neigh = ((adj - I) @ x) / (rowsum(adj - I) + 1e-12)
            #       = (adj @ x - x) * 1/(rowsum(adj) - 1 + 1e-12)
            inv = pl.reciprocal(rowsum - 1.0 + 1e-12)              # (TM, 1)
            neigh = (acc - x_row) * inv                            # (TM, F)
            # relu(cat([x, neigh], -1) @ W) == relu(x @ W1 + neigh @ W2)
            h = (jnp.dot(x_row, w1_ref[...],
                         preferred_element_type=jnp.float32)
                 + jnp.dot(neigh, w2_ref[...],
                           preferred_element_type=jnp.float32))
            h = jnp.maximum(h, 0.0)
            # F.normalize(h, p=2, dim=1) == h / max(||h||_2, 1e-12)
            sq = jnp.sum(h * h, axis=1, keepdims=True)
            out_ref[...] = (h * jax.lax.rsqrt(jnp.maximum(sq, 1e-24))
                            ).astype(out_ref.dtype)

    return kernel


def gs_block_forward(x, adj, weight, *, tm=512, tk=1024,
                     x_resident_bytes=8 * 1024 * 1024):
    n, f = x.shape
    assert adj.shape == (n, n)
    assert weight.shape[0] == 2 * f
    d = weight.shape[1]

    x = x.astype(jnp.float32)
    weight = weight.astype(jnp.float32)
    # Adjacency entries are 0/1 so the bf16 cast is bit-exact and halves the
    # dominant O(N^2) HBM stream.
    # TODO(synk): keep adj in f32 if it ever carries non-binary edge weights.
    adj = adj.astype(jnp.bfloat16)

    # Clamp tiles to the (padded) problem; keep >= 2 row tiles where possible
    # so the "parallel" axis can split across v7x's two TensorCores.
    tm = min(tm, _round_up(n, 256))
    tk = min(tk, _round_up(n, 256))
    while tm > 256 and -(-n // tm) < 2:
        tm //= 2

    # Independent padding: adj rows -> multiple of tm, cols -> multiple of tk,
    # features / outputs -> lane width (128).  No lcm blow-up.
    n_row_pad = _round_up(n, tm)
    n_col_pad = _round_up(n, tk)
    f_pad = _round_up(f, 128)
    d_pad = _round_up(d, 128)

    # If F needs lane padding anyway, fold rowsum(adj) into the MXU via a ones
    # column in the neighbour-side x; otherwise use the explicit reduce.
    fold_rowsum = f_pad > f
    rowsum_col = f if fold_rowsum else None

    x_row_p = jnp.pad(x, ((0, n_row_pad - n), (0, f_pad - f)))
    x_col_p = jnp.pad(x, ((0, n_col_pad - n), (0, f_pad - f)))
    if fold_rowsum:
        # (adj @ x_col)[:, f] == rowsum(adj); padded adj columns are zero so the
        # padded x_col rows never contribute.
        x_col_p = x_col_p.at[:n, f].set(1.0)
    adj_p = jnp.pad(adj, ((0, n_row_pad - n), (0, n_col_pad - n)))
    w1 = jnp.pad(weight[:f], ((0, f_pad - f), (0, d_pad - d)))
    w2 = jnp.pad(weight[f:], ((0, f_pad - f), (0, d_pad - d)))

    # Keep the neighbour-side x fully VMEM-resident when it fits (fetched once
    # instead of once per (i, k) grid step); otherwise stream (tk, f_pad) tiles.
    x_col_bytes = n_col_pad * f_pad * 4
    x_col_resident = x_col_bytes <= x_resident_bytes
    if x_col_resident:
        x_col_spec = pl.BlockSpec((n_col_pad, f_pad), lambda i, k: (0, 0))
        x_col_tile_bytes = x_col_bytes
    else:
        x_col_spec = pl.BlockSpec((tk, f_pad), lambda i, k: (k, 0))
        x_col_tile_bytes = tk * f_pad * 4

    grid = (n_row_pad // tm, n_col_pad // tk)

    scratch_shapes = [pltpu.VMEM((tm, f_pad), jnp.float32)]        # adj @ x acc
    if not fold_rowsum:
        scratch_shapes.append(pltpu.VMEM((tm, 1), jnp.float32))    # rowsum acc

    # VMEM budget: double buffers for pipelined operands + resident scratch,
    # then ~1.5x headroom.  Stays well below v7x's 64 MiB for typical tiles.
    need = (2 * (tm * tk * 2                 # adj tile (bf16)
                 + tm * f_pad * 4            # x rows (self part)
                 + x_col_tile_bytes          # x (neighbour side)
                 + 2 * f_pad * d_pad * 4     # W1 + W2
                 + tm * d_pad * 4)           # output tile
            + tm * f_pad * 4                 # accumulator scratch
            + (0 if fold_rowsum else tm * 128 * 4))
    vmem_limit = max(32 * 1024 * 1024, int(1.5 * need))

    out_p = pl.pallas_call(
        _make_gs_kernel(tk, x_col_resident, rowsum_col),
        out_shape=jax.ShapeDtypeStruct((n_row_pad, d_pad), jnp.float32),
        grid_spec=pltpu.PrefetchScalarGridSpec(
            num_scalar_prefetch=0,
            grid=grid,
            in_specs=[
                pl.BlockSpec((tm, f_pad), lambda i, k: (i, 0)),     # x rows (self)
                x_col_spec,                                         # x (neighbour side)
                # TODO(synk): pipeline_mode=pl.Buffered(3) here if profiling
                # shows exposed DMA on the reduction axis after the bf16 cast.
                pl.BlockSpec((tm, tk), lambda i, k: (i, k)),        # adjacency tile (bf16)
                pl.BlockSpec((f_pad, d_pad), lambda i, k: (0, 0)),  # W1
                pl.BlockSpec((f_pad, d_pad), lambda i, k: (0, 0)),  # W2
            ],
            out_specs=pl.BlockSpec((tm, d_pad), lambda i, k: (i, 0)),
            scratch_shapes=scratch_shapes,
        ),
        compiler_params=pltpu.CompilerParams(
            dimension_semantics=("parallel", "arbitrary"),
            vmem_limit_bytes=vmem_limit,
        ),
    )(x_row_p, x_col_p, adj_p, w1, w2)

    return out_p[:n, :d]


def reference_forward(x, adj, weight):
    """Pure-JAX reference mirroring the PyTorch module."""
    n = adj.shape[0]
    a = adj - jnp.eye(n, dtype=adj.dtype)
    a = a / (jnp.sum(a, axis=1, keepdims=True) + 1e-12)
    neigh = jnp.dot(a, x, precision=jax.lax.Precision.HIGHEST)
    combined = jnp.concatenate([x, neigh], axis=1)
    h = jnp.maximum(jnp.dot(combined, weight,
                            precision=jax.lax.Precision.HIGHEST), 0.0)
    norm = jnp.maximum(jnp.linalg.norm(h, axis=1, keepdims=True), 1e-12)
    return h / norm


def _make_inputs(key, n, f, d):
    kx, kadj, kw = jax.random.split(key, 3)
    x = jax.random.normal(kx, (n, f), dtype=jnp.float32)
    # Symmetric binary adjacency with self-loops (so adj - eye is sensible).
    adj_rand = jax.random.uniform(kadj, (n, n), dtype=jnp.float32)
    adj = (adj_rand < 0.5).astype(jnp.float32)
    adj = jnp.maximum(adj, adj.T)
    adj = jnp.maximum(adj, jnp.eye(n, dtype=jnp.float32))
    # kaiming_uniform_ (a=0): bound = sqrt(6 / fan_in), fan_in = weight.size(1)
    bound = math.sqrt(6.0 / d)
    weight = jax.random.uniform(kw, (2 * f, d), dtype=jnp.float32,
                                minval=-bound, maxval=bound)
    return x, adj, weight


def _check(name, out, ref, tol=5e-5):
    assert out.shape == ref.shape, f"{name}: shape {out.shape} vs {ref.shape}"
    err = jnp.max(jnp.abs(out - ref))
    assert jnp.allclose(out, ref, atol=tol, rtol=tol), (
        f"{name}: mismatch, max abs err {err}")


if __name__ == "__main__":
    key = jax.random.PRNGKey(0)
    k1, k2 = jax.random.split(key)

    # Aligned case (F, D multiples of 128): resident x_col, explicit rowsum,
    # 2 row tiles x 1 reduction step.
    x, adj, w = _make_inputs(k1, 512, 128, 128)
    ref = reference_forward(x, adj, w)
    out = jax.block_until_ready(gs_block_forward(x, adj, w))
    _check("aligned", out, ref)

    # Same problem with smaller tiles: resident x_col sliced over multiple
    # reduction steps (exercises init/accumulate/finalize across k).
    out_small = jax.block_until_ready(gs_block_forward(x, adj, w, tm=256, tk=256))
    _check("aligned/small-tiles", out_small, ref)

    # Ragged case (N, F, D not tile-aligned): zero padding + MXU-folded rowsum.
    x2, adj2, w2 = _make_inputs(k2, 200, 96, 80)
    ref2 = reference_forward(x2, adj2, w2)
    out2 = jax.block_until_ready(gs_block_forward(x2, adj2, w2))
    _check("ragged", out2, ref2)

    # Ragged case with streamed (non-resident) neighbour-side x and multiple
    # reduction steps (exercises the fallback tiling path).
    out3 = jax.block_until_ready(
        gs_block_forward(x2, adj2, w2, tm=256, tk=128, x_resident_bytes=0))
    _check("ragged/streamed", out3, ref2)

    print("KERNEL_OK")
</pallas_src>

<mosaic_0001>
module attributes {stable_mosaic.version = 11 : i64} {
  func.func @kernel(%arg0: i32, %arg1: i32, %arg2: memref<256x128xf32, #tpu.memory_space<vmem>>, %arg3: memref<512x128xf32, #tpu.memory_space<vmem>>, %arg4: memref<256x512xbf16, #tpu.memory_space<vmem>>, %arg5: memref<128x128xf32, #tpu.memory_space<vmem>>, %arg6: memref<128x128xf32, #tpu.memory_space<vmem>>, %arg7: memref<256x128xf32, #tpu.memory_space<vmem>>, %arg8: memref<256x128xf32, #tpu.memory_space<vmem>>, %arg9: memref<256x1xf32, #tpu.memory_space<vmem>>) attributes {dimension_semantics = [#tpu.dimension_semantics<parallel>, #tpu.dimension_semantics<arbitrary>], iteration_bounds = array<i64: 2, 1>, scalar_prefetch = 0 : i64, scratch_operands = 2 : i64, tpu.core_type = #tpu.core_type<tc>, window_params = [{transform_indices = @transform_0, window_bounds = array<i64: 256, 128>}, {pipeline_mode = #tpu.pipeline_mode<synchronous>, transform_indices = @transform_1, window_bounds = array<i64: 512, 128>}, {transform_indices = @transform_2, window_bounds = array<i64: 256, 512>}, {pipeline_mode = #tpu.pipeline_mode<synchronous>, transform_indices = @transform_3, window_bounds = array<i64: 128, 128>}, {pipeline_mode = #tpu.pipeline_mode<synchronous>, transform_indices = @transform_4, window_bounds = array<i64: 128, 128>}, {transform_indices = @transform_5, window_bounds = array<i64: 256, 128>}]} {
    %c0_i32 = arith.constant 0 : i32
    %0 = arith.cmpi eq, %arg1, %c0_i32 : i32
    %1 = arith.extui %0 : i1 to i32
    %c0_i32_0 = arith.constant 0 : i32
    %2 = arith.cmpi ne, %1, %c0_i32_0 : i32
    scf.if %2 {
      %cst_14 = arith.constant 0.000000e+00 : f32
      %21 = vector.broadcast %cst_14 : f32 to vector<256x128xf32>
      %c0_15 = arith.constant 0 : index
      %c0_16 = arith.constant 0 : index
      %22 = vector.load %arg8[%c0_15, %c0_16] : memref<256x128xf32, #tpu.memory_space<vmem>>, vector<256x128xf32>
      tpu.vector_store %arg8[%c0_15, %c0_16], %21 {strides = array<i32>} : memref<256x128xf32, #tpu.memory_space<vmem>>, vector<256x128xf32>,
      %cst_17 = arith.constant 0.000000e+00 : f32
      %23 = vector.broadcast %cst_17 : f32 to vector<256x1xf32>
      %c0_18 = arith.constant 0 : index
      %c0_19 = arith.constant 0 : index
      %24 = vector.load %arg9[%c0_18, %c0_19] : memref<256x1xf32, #tpu.memory_space<vmem>>, vector<256x1xf32>
      tpu.vector_store %arg9[%c0_18, %c0_19], %23 {strides = array<i32>} : memref<256x1xf32, #tpu.memory_space<vmem>>, vector<256x1xf32>,
    } else {
    }
    %c0 = arith.constant 0 : index
    %c0_1 = arith.constant 0 : index
    %3 = vector.load %arg4[%c0, %c0_1] : memref<256x512xbf16, #tpu.memory_space<vmem>>, vector<256x512xbf16>
    %4 = arith.extf %3 : vector<256x512xbf16> to vector<256x512xf32>
    %c512_i32 = arith.constant 512 : i32
    %5 = arith.muli %arg1, %c512_i32 : i32
    %6 = tpu.assume_multiple %5, 512 : i32
    %7 = arith.index_cast %6 : i32 to index
    %c0_2 = arith.constant 0 : index
    %8 = vector.load %arg3[%7, %c0_2] : memref<512x128xf32, #tpu.memory_space<vmem>>, vector<512x128xf32>
    %c0_3 = arith.constant 0 : index
    %c0_4 = arith.constant 0 : index
    %9 = vector.load %arg8[%c0_3, %c0_4] : memref<256x128xf32, #tpu.memory_space<vmem>>, vector<256x128xf32>
    %cst = arith.constant dense<0.000000e+00> : vector<256x128xf32>
    %10 = tpu.matmul %4, %8, %cst {dimension_numbers = #tpu.dot_dimension_numbers<[1], [0], [0], [1], [0, 0, 1, 1], [], []>} : vector<256x512xf32>, vector<512x128xf32>, vector<256x128xf32> -> vector<256x128xf32>
    %11 = arith.addf %9, %10 : vector<256x128xf32>
    %c0_5 = arith.constant 0 : index
    %c0_6 = arith.constant 0 : index
    %12 = vector.load %arg8[%c0_5, %c0_6] : memref<256x128xf32, #tpu.memory_space<vmem>>, vector<256x128xf32>
    tpu.vector_store %arg8[%c0_5, %c0_6], %11 {strides = array<i32>} : memref<256x128xf32, #tpu.memory_space<vmem>>, vector<256x128xf32>,
    %c0_7 = arith.constant 0 : index
    %c0_8 = arith.constant 0 : index
    %13 = vector.load %arg9[%c0_7, %c0_8] : memref<256x1xf32, #tpu.memory_space<vmem>>, vector<256x1xf32>
    %cst_9 = arith.constant dense<0.000000e+00> : vector<256xf32>
    %14 = vector.multi_reduction <add>, %4, %cst_9 [1] : vector<256x512xf32> to vector<256xf32>
    %15 = vector.shape_cast %14 : vector<256xf32> to vector<256x1xf32>
    %16 = arith.addf %13, %15 : vector<256x1xf32>
    %c0_10 = arith.constant 0 : index
    %c0_11 = arith.constant 0 : index
    %17 = vector.load %arg9[%c0_10, %c0_11] : memref<256x1xf32, #tpu.memory_space<vmem>>, vector<256x1xf32>
    tpu.vector_store %arg9[%c0_10, %c0_11], %16 {strides = array<i32>} : memref<256x1xf32, #tpu.memory_space<vmem>>, vector<256x1xf32>,
    %c0_i32_12 = arith.constant 0 : i32
    %18 = arith.cmpi eq, %arg1, %c0_i32_12 : i32
    %19 = arith.extui %18 : i1 to i32
    %c0_i32_13 = arith.constant 0 : i32
    %20 = arith.cmpi ne, %19, %c0_i32_13 : i32
    scf.if %20 {
      %c0_14 = arith.constant 0 : index
      %c0_15 = arith.constant 0 : index
      %21 = vector.load %arg2[%c0_14, %c0_15] : memref<256x128xf32, #tpu.memory_space<vmem>>, vector<256x128xf32>
      %c0_16 = arith.constant 0 : index
      %c0_17 = arith.constant 0 : index
      %22 = vector.load %arg8[%c0_16, %c0_17] : memref<256x128xf32, #tpu.memory_space<vmem>>, vector<256x128xf32>
      %c0_18 = arith.constant 0 : index
      %c0_19 = arith.constant 0 : index
      %23 = vector.load %arg9[%c0_18, %c0_19] : memref<256x1xf32, #tpu.memory_space<vmem>>, vector<256x1xf32>
      %cst_20 = arith.constant 1.000000e+00 : f32
      %24 = vector.broadcast %cst_20 : f32 to vector<256x1xf32>
      %25 = arith.subf %23, %24 : vector<256x1xf32>
      %cst_21 = arith.constant 9.99999996E-13 : f32
      %26 = vector.broadcast %cst_21 : f32 to vector<256x1xf32>
      %27 = arith.addf %25, %26 : vector<256x1xf32>
      %28 = tpu.reciprocal %27 : vector<256x1xf32> -> vector<256x1xf32>
      %29 = arith.subf %22, %21 : vector<256x128xf32>
      %30 = vector.broadcast %28 : vector<256x1xf32> to vector<256x128xf32>
      %31 = arith.mulf %29, %30 : vector<256x128xf32>
      %c0_22 = arith.constant 0 : index
      %c0_23 = arith.constant 0 : index
      %32 = vector.load %arg5[%c0_22, %c0_23] : memref<128x128xf32, #tpu.memory_space<vmem>>, vector<128x128xf32>
      %cst_24 = arith.constant dense<0.000000e+00> : vector<256x128xf32>
      %33 = tpu.matmul %21, %32, %cst_24 {dimension_numbers = #tpu.dot_dimension_numbers<[1], [0], [0], [1], [0, 0, 1, 1], [], []>} : vector<256x128xf32>, vector<128x128xf32>, vector<256x128xf32> -> vector<256x128xf32>
      %c0_25 = arith.constant 0 : index
      %c0_26 = arith.constant 0 : index
      %34 = vector.load %arg6[%c0_25, %c0_26] : memref<128x128xf32, #tpu.memory_space<vmem>>, vector<128x128xf32>
      %cst_27 = arith.constant dense<0.000000e+00> : vector<256x128xf32>
      %35 = tpu.matmul %31, %34, %cst_27 {dimension_numbers = #tpu.dot_dimension_numbers<[1], [0], [0], [1], [0, 0, 1, 1], [], []>} : vector<256x128xf32>, vector<128x128xf32>, vector<256x128xf32> -> vector<256x128xf32>
      %36 = arith.addf %33, %35 : vector<256x128xf32>
      %cst_28 = arith.constant 0.000000e+00 : f32
      %37 = vector.broadcast %cst_28 : f32 to vector<256x128xf32>
      %38 = arith.maximumf %36, %37 : vector<256x128xf32>
      %39 = arith.mulf %38, %38 : vector<256x128xf32>
      %cst_29 = arith.constant dense<0.000000e+00> : vector<256xf32>
      %40 = vector.multi_reduction <add>, %39, %cst_29 [1] : vector<256x128xf32> to vector<256xf32>
      %41 = vector.shape_cast %40 : vector<256xf32> to vector<256x1xf32>
      %cst_30 = arith.constant 1.000000e-24 : f32
      %42 = vector.broadcast %cst_30 : f32 to vector<256x1xf32>
      %43 = arith.maximumf %41, %42 : vector<256x1xf32>
      %44 = math.rsqrt %43 : vector<256x1xf32>
      %45 = vector.broadcast %44 : vector<256x1xf32> to vector<256x128xf32>
      %46 = arith.mulf %38, %45 : vector<256x128xf32>
      %c0_31 = arith.constant 0 : index
      %c0_32 = arith.constant 0 : index
      %47 = vector.load %arg7[%c0_31, %c0_32] : memref<256x128xf32, #tpu.memory_space<vmem>>, vector<256x128xf32>
      tpu.vector_store %arg7[%c0_31, %c0_32], %46 {strides = array<i32>} : memref<256x128xf32, #tpu.memory_space<vmem>>, vector<256x128xf32>,
    } else {
    }
    return
  }
  func.func @transform_0(%arg0: i32, %arg1: i32) -> (i32, i32) {
    %c0_i32 = arith.constant 0 : i32
    %c0_i32_0 = arith.constant 0 : i32
    return %arg0, %c0_i32 : i32, i32
  }
  func.func @transform_1(%arg0: i32, %arg1: i32) -> (i32, i32) {
    %c0_i32 = arith.constant 0 : i32
    %c0_i32_0 = arith.constant 0 : i32
    %c0_i32_1 = arith.constant 0 : i32
    return %c0_i32, %c0_i32_0 : i32, i32
  }
  func.func @transform_2(%arg0: i32, %arg1: i32) -> (i32, i32) {
    %c0_i32 = arith.constant 0 : i32
    return %arg0, %arg1 : i32, i32
  }
  func.func @transform_3(%arg0: i32, %arg1: i32) -> (i32, i32) {
    %c0_i32 = arith.constant 0 : i32
    %c0_i32_0 = arith.constant 0 : i32
    %c0_i32_1 = arith.constant 0 : i32
    return %c0_i32, %c0_i32_0 : i32, i32
  }
  func.func @transform_4(%arg0: i32, %arg1: i32) -> (i32, i32) {
    %c0_i32 = arith.constant 0 : i32
    %c0_i32_0 = arith.constant 0 : i32
    %c0_i32_1 = arith.constant 0 : i32
    return %c0_i32, %c0_i32_0 : i32, i32
  }
  func.func @transform_5(%arg0: i32, %arg1: i32) -> (i32, i32) {
    %c0_i32 = arith.constant 0 : i32
    %c0_i32_0 = arith.constant 0 : i32
    return %arg0, %c0_i32 : i32, i32
  }
}

</mosaic_0001>

<llo_original>
// kernel: tpu_custom_call.1
$region0: #{tpu_custom_call.1}
  #allocation0 [shape = 'u32[]', space=smem, size = 0x4, offset = 0x4, fixed_abs, tag = 'smem constant byte address 0x4 - core index']
  #allocation1 [shape = 'u32[144,128]{1,0:T(1,128)}', space=vmem, size = 0x12000, scoped, tag = 'internal scratch']
  #allocation2 [shape = 'f32[256,128]{1,0:T(8,128)}', space=vmem, size = 0x20000, scoped, tag = 'scratch operand']
  #allocation3 [shape = 'f32[256,1]{1,0:T(8,128)}', space=vmem, size = 0x20000, scoped, tag = 'scratch operand']
  %s0 = inlined_call_operand.hbm [shape: f32[512,128], index: 0, kind: input, shape index: {}]
  %s1 = inlined_call_operand.hbm [shape: f32[512,128], index: 1, kind: input, shape index: {}]
  %s2 = inlined_call_operand.hbm [shape: bf16[512,512], index: 2, kind: input, shape index: {}]
  %s3 = inlined_call_operand.hbm [shape: f32[128,128], index: 3, kind: input, shape index: {}]
  %s4 = inlined_call_operand.hbm [shape: f32[128,128], index: 4, kind: input, shape index: {}]
  %s5 = inlined_call_operand.hbm [shape: f32[512,128], index: 5, kind: output, shape index: {}]
  %s6 = sld [smem:[#allocation0]]
  $region81: #{tpu_custom_call.1} parent=0
    _
  %s8 = ssub.s32 1, %s6
  %s9 = scalar_select 0, %s8, %s6
  $region1: #{tpu_custom_call.1} parent=0
    #allocation4 [shape = 'u8[262144]{0}', space=vmem, size = 0x40000, scoped, tag = 'input window, operand 0']
    #allocation5 [shape = 's32[2]{0}', space=sflag, size = 0x8, scoped, tag = 'scoped memory for tpu_custom_call.1']
    #allocation6 [shape = 's32[2]{0}', space=sflag, size = 0x8, scoped, tag = 'scoped memory for tpu_custom_call.1']
    #allocation7 [shape = 'u8[262144]{0}', space=vmem, size = 0x40000, scoped, tag = 'input window, operand 1, single buffered']
    #allocation8 [shape = 's32[1]{0}', space=sflag, size = 0x4, scoped, tag = 'scoped memory for tpu_custom_call.1']
    #allocation9 [shape = 'u8[524288]{0}', space=vmem, size = 0x80000, scoped, tag = 'input window, operand 2']
    #allocation10 [shape = 'u8[65536]{0}', space=vmem, size = 0x10000, scoped, tag = 'input window, operand 3, single buffered']
    #allocation11 [shape = 'u8[65536]{0}', space=vmem, size = 0x10000, scoped, tag = 'input window, operand 4, single buffered']
    #allocation12 [shape = 's32[1]{0}', space=sflag, size = 0x4, scoped, tag = 'scoped memory for tpu_custom_call.1']
    #allocation13 [shape = 'u8[262144]{0}', space=vmem, size = 0x40000, scoped, tag = 'output window, operand 0']
    %10 = vsyncpa [#allocation5], 0
    %s11 = scalar_lea.sflag [#allocation5], 1
    %12 = vsyncpa %s11, 0
    %13 = vsyncpa [#allocation8], 0
    %14 = vsyncpa [#allocation12], 0
    %15 = vsyncpa [#allocation6], 0
    %s16 = scalar_lea.sflag [#allocation6], 1
    %17 = vsyncpa %s16, 0
    loop: start=0, step=1, limit=4
    $region2: #{tpu_custom_call.1} parent=1 // loop_pre_header
      _
    $region3: #{tpu_custom_call.1} parent=1 // loop_header
      %s19 = sphi 0, %s23
      %p20 = scmp.ge.s32.totalorder %s19, 4
      %s26 = sphi 0, %s38
      %s27 = sphi 0, %s34
      %s28 = sphi 0, %s26
      %s29 = sphi 0, %s27
      %s30 = sphi 0, %s28
      %s31 = sphi 0, %s29
      %s41 = sphi 0, %s43
      %s44 = sphi 0, %s41
      %s45 = sphi 0, %s44
      %s61 = sphi 0, %s45
      %s65 = sphi 0, %s65
      %s67 = sphi 0, %s65
      %s68 = sphi 0, %s67
      %s82 = sphi 0, %s68
      %s90 = sphi 0, %s92
      %s93 = sphi 0, %s90
      %s94 = sphi 0, %s93
      %s110 = sphi 0, %s94
      %s114 = sphi 0, %s114
      %s116 = sphi 0, %s114
      %s117 = sphi 0, %s116
      %s131 = sphi 0, %s117
      %s135 = sphi 0, %s135
      %s137 = sphi 0, %s135
      %s138 = sphi 0, %s137
      %s152 = sphi 0, %s138
      %s158 = sphi 0, %s160
      %s161 = sphi 0, %s158
      %s162 = sphi 0, %s161
      %s178 = sphi 0, %s162
    $region4: #{tpu_custom_call.1} parent=1 // loop_header_branch
      %22 = sbr.rel (%p20) target = $region8
    $region5: #{tpu_custom_call.1} parent=1 // loop_body
      %s24 = ssub.s32 %s19, 1
      %s25 = ssub.s32 %s19, 2
      %s32 = sadd.s32 1, %s27
      %p33 = scmp.ge.s32.totalorder %s32, 1
      %s34 = scalar_select %p33, 0, %s32
      %s35 = sadd.s32 1, %s26
      %s36 = scalar_select %p33, %s35, %s26
      %p37 = scmp.ge.s32.totalorder %s36, 2
      %s38 = scalar_select %p37, 0, %s36
      %s39 = ssub.s32 %s26, %s38
      %p40 = scmp.eq.s32.totalorder %s39, 0
      %s42 = sadd.s32 %s41, 1
      %s43 = scalar_select %p40, %s41, %s42
      %p46 = pneg %p40
      %p47 = scmp.eq.s32.totalorder %s19, 1
      %p48 = por %p46, %p47
      %p49 = scmp.ne.s32.totalorder %s41, %s44
      %p50 = scmp.eq.s32.totalorder %s19, 0
      %p51 = por %p49, %p50
      %p52 = scmp.ne.s32.totalorder %s41, %s44
      %p53 = scmp.eq.s32.totalorder %s24, 1
      %p54 = por %p52, %p53
      %p55 = scmp.ne.s32.totalorder %s44, %s45
      %p56 = scmp.eq.s32.totalorder %s24, 0
      %p57 = por %p55, %p56
      %p58 = scmp.ne.s32.totalorder %s44, %s45
      %p59 = scmp.eq.s32.totalorder %s25, 1
      %p60 = por %p58, %p59
      %p62 = scmp.ne.s32.totalorder %s45, %s61
      %p63 = scmp.eq.s32.totalorder %s25, 0
      %p64 = por %p62, %p63
      %s66 = sadd.s32 %s65, 1
      %p69 = scmp.eq.s32.totalorder %s19, 1
      %p70 = scmp.ne.s32.totalorder %s65, %s67
      %p71 = scmp.eq.s32.totalorder %s19, 0
      %p72 = por %p70, %p71
      %p73 = scmp.ne.s32.totalorder %s65, %s67
      %p74 = scmp.eq.s32.totalorder %s24, 1
      %p75 = por %p73, %p74
      %p76 = scmp.ne.s32.totalorder %s67, %s68
      %p77 = scmp.eq.s32.totalorder %s24, 0
      %p78 = por %p76, %p77
      %p79 = scmp.ne.s32.totalorder %s67, %s68
      %p80 = scmp.eq.s32.totalorder %s25, 1
      %p81 = por %p79, %p80
      %p83 = scmp.ne.s32.totalorder %s68, %s82
      %p84 = scmp.eq.s32.totalorder %s25, 0
      %p85 = por %p83, %p84
      %s86 = ssub.s32 %s26, %s38
      %s87 = ssub.s32 %s27, %s34
      %s88 = sor.u32 %s86, %s87
      %p89 = scmp.eq.s32.totalorder %s88, 0
      %s91 = sadd.s32 %s90, 1
      %s92 = scalar_select %p89, %s90, %s91
      %p95 = pneg %p89
      %p96 = scmp.eq.s32.totalorder %s19, 1
      %p97 = por %p95, %p96
      %p98 = scmp.ne.s32.totalorder %s90, %s93
      %p99 = scmp.eq.s32.totalorder %s19, 0
      %p100 = por %p98, %p99
      %p101 = scmp.ne.s32.totalorder %s90, %s93
      %p102 = scmp.eq.s32.totalorder %s24, 1
      %p103 = por %p101, %p102
      %p104 = scmp.ne.s32.totalorder %s93, %s94
      %p105 = scmp.eq.s32.totalorder %s24, 0
      %p106 = por %p104, %p105
      %p107 = scmp.ne.s32.totalorder %s93, %s94
      %p108 = scmp.eq.s32.totalorder %s25, 1
      %p109 = por %p107, %p108
      %p111 = scmp.ne.s32.totalorder %s94, %s110
      %p112 = scmp.eq.s32.totalorder %s25, 0
      %p113 = por %p111, %p112
      %s115 = sadd.s32 %s114, 1
      %p118 = scmp.eq.s32.totalorder %s19, 1
      %p119 = scmp.ne.s32.totalorder %s114, %s116
      %p120 = scmp.eq.s32.totalorder %s19, 0
      %p121 = por %p119, %p120
      %p122 = scmp.ne.s32.totalorder %s114, %s116
      %p123 = scmp.eq.s32.totalorder %s24, 1
      %p124 = por %p122, %p123
      %p125 = scmp.ne.s32.totalorder %s116, %s117
      %p126 = scmp.eq.s32.totalorder %s24, 0
      %p127 = por %p125, %p126
      %p128 = scmp.ne.s32.totalorder %s116, %s117
      %p129 = scmp.eq.s32.totalorder %s25, 1
      %p130 = por %p128, %p129
      %p132 = scmp.ne.s32.totalorder %s117, %s131
      %p133 = scmp.eq.s32.totalorder %s25, 0
      %p134 = por %p132, %p133
      %s136 = sadd.s32 %s135, 1
      %p139 = scmp.eq.s32.totalorder %s19, 1
      %p140 = scmp.ne.s32.totalorder %s135, %s137
      %p141 = scmp.eq.s32.totalorder %s19, 0
      %p142 = por %p140, %p141
      %p143 = scmp.ne.s32.totalorder %s135, %s137
      %p144 = scmp.eq.s32.totalorder %s24, 1
      %p145 = por %p143, %p144
      %p146 = scmp.ne.s32.totalorder %s137, %s138
      %p147 = scmp.eq.s32.totalorder %s24, 0
      %p148 = por %p146, %p147
      %p149 = scmp.ne.s32.totalorder %s137, %s138
      %p150 = scmp.eq.s32.totalorder %s25, 1
      %p151 = por %p149, %p150
      %p153 = scmp.ne.s32.totalorder %s138, %s152
      %p154 = scmp.eq.s32.totalorder %s25, 0
      %p155 = por %p153, %p154
      %s156 = ssub.s32 %s26, %s38
      %p157 = scmp.eq.s32.totalorder %s156, 0
      %s159 = sadd.s32 %s158, 1
      %s160 = scalar_select %p157, %s158, %s159
      %p163 = pneg %p157
      %p164 = scmp.eq.s32.totalorder %s19, 1
      %p165 = por %p163, %p164
      %p166 = scmp.ne.s32.totalorder %s158, %s161
      %p167 = scmp.eq.s32.totalorder %s19, 0
      %p168 = por %p166, %p167
      %p169 = scmp.ne.s32.totalorder %s158, %s161
      %p170 = scmp.eq.s32.totalorder %s24, 1
      %p171 = por %p169, %p170
      %p172 = scmp.ne.s32.totalorder %s161, %s162
      %p173 = scmp.eq.s32.totalorder %s24, 0
      %p174 = por %p172, %p173
      %p175 = scmp.ne.s32.totalorder %s161, %s162
      %p176 = scmp.eq.s32.totalorder %s25, 1
      %p177 = por %p175, %p176
      %p179 = scmp.ne.s32.totalorder %s162, %s178
      %p180 = scmp.eq.s32.totalorder %s25, 0
      %p181 = por %p179, %p180
      %p182 = scmp.le.s32.totalorder 1, %s19
      %p183 = scmp.lt.s32.totalorder %s19, 3
      %p184 = pnand %p182, %p183
      %p185 = pneg %p184
      // Predicated region
      $region9: #{tpu_custom_call.1} parent=5 // pred_check
        _
      $region10: #{tpu_custom_call.1} parent=5 // pred_check_branch
        %187 = sbr.rel (%p184) target = $region12
      $region11: #{tpu_custom_call.1} parent=5 // pred_region
        %s188 = ssub.s32 %s19, 1
        // Predicated region
        $region13: #{tpu_custom_call.1} parent=11 // pred_check
          %p189 = pneg %p78
        $region14: #{tpu_custom_call.1} parent=11 // pred_check_branch
          %191 = sbr.rel (%p189) target = $region16
        $region15: #{tpu_custom_call.1} parent=11 // pred_region
          %s193 = ssub.s32 8192, 8192
          %194 = vsyncadd [#allocation8], %s193
          %s195 = sshll.u32 [#allocation7], 4
          %s196 = int_to_ptr.vmem [resolvable:$true] %s195
          %201 = dma.hbm_to_vmem [thread:$0]  %s1, 8192, %s196, [#allocation8], 128, 128, 8
        $region16: #{tpu_custom_call.1} parent=11 // pred_fallthru
          _
        // Predicated region
        $region17: #{tpu_custom_call.1} parent=11 // pred_check
          %p202 = pneg %p127
        $region18: #{tpu_custom_call.1} parent=11 // pred_check_branch
          %204 = sbr.rel (%p202) target = $region20
        $region19: #{tpu_custom_call.1} parent=11 // pred_region
          %s206 = ssub.s32 2048, 2048
          %207 = vsyncadd [#allocation8], %s206
          %s208 = sshll.u32 [#allocation10], 4
          %s209 = int_to_ptr.vmem [resolvable:$true] %s208
          %214 = dma.hbm_to_vmem [thread:$0]  %s3, 2048, %s209, [#allocation8], 128, 128, 8
        $region20: #{tpu_custom_call.1} parent=11 // pred_fallthru
          _
        // Predicated region
        $region21: #{tpu_custom_call.1} parent=11 // pred_check
          %p215 = pneg %p148
        $region22: #{tpu_custom_call.1} parent=11 // pred_check_branch
          %217 = sbr.rel (%p215) target = $region24
        $region23: #{tpu_custom_call.1} parent=11 // pred_region
          %s219 = ssub.s32 2048, 2048
          %220 = vsyncadd [#allocation12], %s219
          %s221 = sshll.u32 [#allocation11], 4
          %s222 = int_to_ptr.vmem [resolvable:$true] %s221
          %227 = dma.hbm_to_vmem [thread:$0]  %s4, 2048, %s222, [#allocation12], 128, 128, 8
        $region24: #{tpu_custom_call.1} parent=11 // pred_fallthru
          _
      $region12: #{tpu_custom_call.1} parent=5 // pred_fallthru
        _
      %p228 = scmp.lt.s32.totalorder %s19, 2
      // Predicated region
      $region25: #{tpu_custom_call.1} parent=5 // pred_check
        %p229 = pneg %p228
      $region26: #{tpu_custom_call.1} parent=5 // pred_check_branch
        %231 = sbr.rel (%p229) target = $region28
      $region27: #{tpu_custom_call.1} parent=5 // pred_region
        // Predicated region
        $region29: #{tpu_custom_call.1} parent=27 // pred_check
          %p232 = pneg %p51
        $region30: #{tpu_custom_call.1} parent=27 // pred_check_branch
          %234 = sbr.rel (%p232) target = $region32
        $region31: #{tpu_custom_call.1} parent=27 // pred_region
          %s235 = sand.u32 %s19, 1
          %s236 = scalar_lea.sflag [#allocation5], %s235
          %s237 = sand.u32 %s41, 1
          %s238 = smul.addr %s237, 256
          %s239 = scalar_lea.vmem [#allocation4], %s238
          %s240 = smul.u32 32, %s26
          %s242 = ssub.s32 4096, 4096
          %243 = vsyncadd %s236, %s242
          %s244 = smul.addr %s240, 128
          %s245 = scalar_lea.hbm %s0, %s244
          %s246 = sshll.u32 %s239, 4
          %s247 = int_to_ptr.vmem [resolvable:$true] %s246
          %252 = dma.hbm_to_vmem [thread:$0]  %s245, 4096, %s247, %s236, 128, 128, 8
        $region32: #{tpu_custom_call.1} parent=27 // pred_fallthru
          _
        // Predicated region
        $region33: #{tpu_custom_call.1} parent=27 // pred_check
          %p253 = pneg %p100
        $region34: #{tpu_custom_call.1} parent=27 // pred_check_branch
          %255 = sbr.rel (%p253) target = $region36
        $region35: #{tpu_custom_call.1} parent=27 // pred_region
          %s256 = sand.u32 %s19, 1
          %s257 = scalar_lea.sflag [#allocation5], %s256
          %s258 = sand.u32 %s90, 1
          %s259 = smul.addr %s258, 512
          %s260 = scalar_lea.vmem [#allocation9], %s259
          %s261 = smul.u32 32, %s26
          %s262 = smul.u32 4, %s27
          %s264 = ssub.s32 8192, 8192
          %265 = vsyncadd %s257, %s264
          %s266 = smul.addr %s261, 4
          %s267 = sadd.s32 %s262, %s266
          %s268 = smul.addr %s267, 64
          %s269 = scalar_lea.hbm %s2, %s268
          %s270 = sshll.u32 %s260, 4
          %s271 = int_to_ptr.vmem [resolvable:$true] %s270
          %276 = dma.hbm_to_vmem [thread:$0]  %s269, 8192, %s271, %s257, 256, 256, 16
        $region36: #{tpu_custom_call.1} parent=27 // pred_fallthru
          _
      $region28: #{tpu_custom_call.1} parent=5 // pred_fallthru
        _
      %p277 = scmp.le.s32.totalorder 1, %s19
      %p278 = scmp.lt.s32.totalorder %s19, 3
      %p279 = pnand %p277, %p278
      %p280 = pneg %p279
      // Predicated region
      $region37: #{tpu_custom_call.1} parent=5 // pred_check
        _
      $region38: #{tpu_custom_call.1} parent=5 // pred_check_branch
        %282 = sbr.rel (%p279) target = $region40
      $region39: #{tpu_custom_call.1} parent=5 // pred_region
        %s283 = ssub.s32 %s19, 1
        %s284 = sand.u32 %s24, 1
        %s285 = scalar_lea.sflag [#allocation5], %s284
        %s286 = sand.u32 %s44, 1
        %s287 = smul.addr %s286, 256
        %s288 = scalar_lea.vmem [#allocation4], %s287
        // Predicated region
        $region41: #{tpu_custom_call.1} parent=39 // pred_check
          %p289 = pneg %p57
        $region42: #{tpu_custom_call.1} parent=39 // pred_check_branch
          %291 = sbr.rel (%p289) target = $region44
        $region43: #{tpu_custom_call.1} parent=39 // pred_region
          %292 = dma.done %s285, 4096
        $region44: #{tpu_custom_call.1} parent=39 // pred_fallthru
          _
        // Predicated region
        $region45: #{tpu_custom_call.1} parent=39 // pred_check
          %p293 = pneg %p78
        $region46: #{tpu_custom_call.1} parent=39 // pred_check_branch
          %295 = sbr.rel (%p293) target = $region48
        $region47: #{tpu_custom_call.1} parent=39 // pred_region
          %296 = dma.done [#allocation8], 8192
        $region48: #{tpu_custom_call.1} parent=39 // pred_fallthru
          _
        %s297 = sand.u32 %s24, 1
        %s298 = scalar_lea.sflag [#allocation5], %s297
        %s299 = sand.u32 %s93, 1
        %s300 = smul.addr %s299, 512
        %s301 = scalar_lea.vmem [#allocation9], %s300
        // Predicated region
        $region49: #{tpu_custom_call.1} parent=39 // pred_check
          %p302 = pneg %p106
        $region50: #{tpu_custom_call.1} parent=39 // pred_check_branch
          %304 = sbr.rel (%p302) target = $region52
        $region51: #{tpu_custom_call.1} parent=39 // pred_region
          %305 = dma.done %s298, 8192
        $region52: #{tpu_custom_call.1} parent=39 // pred_fallthru
          _
        // Predicated region
        $region53: #{tpu_custom_call.1} parent=39 // pred_check
          %p306 = pneg %p127
        $region54: #{tpu_custom_call.1} parent=39 // pred_check_branch
          %308 = sbr.rel (%p306) target = $region56
        $region55: #{tpu_custom_call.1} parent=39 // pred_region
          %309 = dma.done [#allocation8], 2048
        $region56: #{tpu_custom_call.1} parent=39 // pred_fallthru
          _
        // Predicated region
        $region57: #{tpu_custom_call.1} parent=39 // pred_check
          %p310 = pneg %p148
        $region58: #{tpu_custom_call.1} parent=39 // pred_check_branch
          %312 = sbr.rel (%p310) target = $region60
        $region59: #{tpu_custom_call.1} parent=39 // pred_region
          %313 = dma.done [#allocation12], 2048
        $region60: #{tpu_custom_call.1} parent=39 // pred_fallthru
          _
        %s314 = sand.u32 %s24, 1
        %s315 = scalar_lea.sflag [#allocation5], %s314
        %s316 = sand.u32 %s44, 1
        %s317 = smul.addr %s316, 256
        %s318 = scalar_lea.vmem [#allocation4], %s317
        %p319 = pneg %p57
        %p320 = pneg %p54
        %p321 = pneg %p78
        %p322 = pneg %p75
        %s323 = sand.u32 %s24, 1
        %s324 = scalar_lea.sflag [#allocation5], %s323
        %s325 = sand.u32 %s93, 1
        %s326 = smul.addr %s325, 512
        %s327 = scalar_lea.vmem [#allocation9], %s326
        %p328 = pneg %p106
        %p329 = pneg %p103
        %p330 = pneg %p127
        %p331 = pneg %p124
        %p332 = pneg %p148
        %p333 = pneg %p145
        %p334 = pneg %p174
        %p335 = pneg %p171
        %s336 = sand.u32 %s161, 1
        %s337 = scalar_lea.sflag [#allocation6], %s336
        %s338 = sand.u32 %s161, 1
        %s339 = smul.addr %s338, 256
        %s340 = scalar_lea.vmem [#allocation13], %s339
        %s341 = smul.u32 32, %s28
        %s342 = smul.u32 32, %s28
        %s343 = smul.u32 4, %s29
        %s344 = smul.u32 32, %s28
        %p345 = scmp.eq.s32.totalorder %s29, 0
        // Predicated region
        $region61: #{tpu_custom_call.1} parent=39 // pred_check
          %p346 = pneg %p345
        $region62: #{tpu_custom_call.1} parent=39 // pred_check_branch
          %348 = sbr.rel (%p346) target = $region64
        $region63: #{tpu_custom_call.1} parent=39 // pred_region
          %349 = vst [vmem:[#allocation2] sm:$0xff] 0.0
          %350 = vst [vmem:[#allocation2 + $0x8] sm:$0xff] 0.0
          %351 = vst [vmem:[#allocation2 + $0x10] sm:$0xff] 0.0
          %352 = vst [vmem:[#allocation2 + $0x18] sm:$0xff] 0.0
          %353 = vst [vmem:[#allocation2 + $0x20] sm:$0xff] 0.0
          %354 = vst [vmem:[#allocation2 + $0x28] sm:$0xff] 0.0
          %355 = vst [vmem:[#allocation2 + $0x30] sm:$0xff] 0.0
          %356 = vst [vmem:[#allocation2 + $0x38] sm:$0xff] 0.0
          %357 = vst [vmem:[#allocation2 + $0x40] sm:$0xff] 0.0
          %358 = vst [vmem:[#allocation2 + $0x48] sm:$0xff] 0.0
          %359 = vst [vmem:[#allocation2 + $0x50] sm:$0xff] 0.0
          %360 = vst [vmem:[#allocation2 + $0x58] sm:$0xff] 0.0
          %361 = vst [vmem:[#allocation2 + $0x60] sm:$0xff] 0.0
          %362 = vst [vmem:[#allocation2 + $0x68] sm:$0xff] 0.0
          %363 = vst [vmem:[#allocation2 + $0x70] sm:$0xff] 0.0
          %364 = vst [vmem:[#allocation2 + $0x78] sm:$0xff] 0.0
          %365 = vst [vmem:[#allocation2 + $0x80] sm:$0xff] 0.0
          %366 = vst [vmem:[#allocation2 + $0x88] sm:$0xff] 0.0
          %367 = vst [vmem:[#allocation2 + $0x90] sm:$0xff] 0.0
          %368 = vst [vmem:[#allocation2 + $0x98] sm:$0xff] 0.0
          %369 = vst [vmem:[#allocation2 + $0xa0] sm:$0xff] 0.0
          %370 = vst [vmem:[#allocation2 + $0xa8] sm:$0xff] 0.0
          %371 = vst [vmem:[#allocation2 + $0xb0] sm:$0xff] 0.0
          %372 = vst [vmem:[#allocation2 + $0xb8] sm:$0xff] 0.0
          %373 = vst [vmem:[#allocation2 + $0xc0] sm:$0xff] 0.0
          %374 = vst [vmem:[#allocation2 + $0xc8] sm:$0xff] 0.0
          %375 = vst [vmem:[#allocation2 + $0xd0] sm:$0xff] 0.0
          %376 = vst [vmem:[#allocation2 + $0xd8] sm:$0xff] 0.0
          %377 = vst [vmem:[#allocation2 + $0xe0] sm:$0xff] 0.0
          %378 = vst [vmem:[#allocation2 + $0xe8] sm:$0xff] 0.0
          %379 = vst [vmem:[#allocation2 + $0xf0] sm:$0xff] 0.0
          %380 = vst [vmem:[#allocation2 + $0xf8] sm:$0xff] 0.0
          %vm381 = vcmask 7168
          %382 = vst.msk [vmem:[#allocation3] sm:$0xff] %vm381, 0.0
          %383 = vst.msk [vmem:[#allocation3 + $0x8] sm:$0xff] %vm381, 0.0
          %384 = vst.msk [vmem:[#allocation3 + $0x10] sm:$0xff] %vm381, 0.0
          %385 = vst.msk [vmem:[#allocation3 + $0x18] sm:$0xff] %vm381, 0.0
          %386 = vst.msk [vmem:[#allocation3 + $0x20] sm:$0xff] %vm381, 0.0
          %387 = vst.msk [vmem:[#allocation3 + $0x28] sm:$0xff] %vm381, 0.0
          %388 = vst.msk [vmem:[#allocation3 + $0x30] sm:$0xff] %vm381, 0.0
          %389 = vst.msk [vmem:[#allocation3 + $0x38] sm:$0xff] %vm381, 0.0
          %390 = vst.msk [vmem:[#allocation3 + $0x40] sm:$0xff] %vm381, 0.0
          %391 = vst.msk [vmem:[#allocation3 + $0x48] sm:$0xff] %vm381, 0.0
          %392 = vst.msk [vmem:[#allocation3 + $0x50] sm:$0xff] %vm381, 0.0
          %393 = vst.msk [vmem:[#allocation3 + $0x58] sm:$0xff] %vm381, 0.0
          %394 = vst.msk [vmem:[#allocation3 + $0x60] sm:$0xff] %vm381, 0.0
          %395 = vst.msk [vmem:[#allocation3 + $0x68] sm:$0xff] %vm381, 0.0
          %396 = vst.msk [vmem:[#allocation3 + $0x70] sm:$0xff] %vm381, 0.0
          %397 = vst.msk [vmem:[#allocation3 + $0x78] sm:$0xff] %vm381, 0.0
          %398 = vst.msk [vmem:[#allocation3 + $0x80] sm:$0xff] %vm381, 0.0
          %399 = vst.msk [vmem:[#allocation3 + $0x88] sm:$0xff] %vm381, 0.0
          %400 = vst.msk [vmem:[#allocation3 + $0x90] sm:$0xff] %vm381, 0.0
          %401 = vst.msk [vmem:[#allocation3 + $0x98] sm:$0xff] %vm381, 0.0
          %402 = vst.msk [vmem:[#allocation3 + $0xa0] sm:$0xff] %vm381, 0.0
          %403 = vst.msk [vmem:[#allocation3 + $0xa8] sm:$0xff] %vm381, 0.0
          %404 = vst.msk [vmem:[#allocation3 + $0xb0] sm:$0xff] %vm381, 0.0
          %405 = vst.msk [vmem:[#allocation3 + $0xb8] sm:$0xff] %vm381, 0.0
          %406 = vst.msk [vmem:[#allocation3 + $0xc0] sm:$0xff] %vm381, 0.0
          %407 = vst.msk [vmem:[#allocation3 + $0xc8] sm:$0xff] %vm381, 0.0
          %408 = vst.msk [vmem:[#allocation3 + $0xd0] sm:$0xff] %vm381, 0.0
          %409 = vst.msk [vmem:[#allocation3 + $0xd8] sm:$0xff] %vm381, 0.0
          %410 = vst.msk [vmem:[#allocation3 + $0xe0] sm:$0xff] %vm381, 0.0
          %411 = vst.msk [vmem:[#allocation3 + $0xe8] sm:$0xff] %vm381, 0.0
          %412 = vst.msk [vmem:[#allocation3 + $0xf0] sm:$0xff] %vm381, 0.0
          %413 = vst.msk [vmem:[#allocation3 + $0xf8] sm:$0xff] %vm381, 0.0
        $region64: #{tpu_custom_call.1} parent=39 // pred_fallthru
          _
        %v414 = vld [vmem:[%s301] sm:$0xff]
        %v415 = vld [vmem:[%s301 + $0x8] sm:$0xff]
        %v416 = vld [vmem:[%s301 + $0x10] sm:$0xff]
        %v417 = vld [vmem:[%s301 + $0x18] sm:$0xff]
        %v418 = vld [vmem:[%s301 + $0x20] sm:$0xff]
        %v419 = vld [vmem:[%s301 + $0x28] sm:$0xff]
        %v420 = vld [vmem:[%s301 + $0x30] sm:$0xff]
        %v421 = vld [vmem:[%s301 + $0x38] sm:$0xff]
        %v422 = vld [vmem:[%s301 + $0x40] sm:$0xff]
        %v423 = vld [vmem:[%s301 + $0x48] sm:$0xff]
        %v424 = vld [vmem:[%s301 + $0x50] sm:$0xff]
        %v425 = vld [vmem:[%s301 + $0x58] sm:$0xff]
        %v426 = vld [vmem:[%s301 + $0x60] sm:$0xff]
        %v427 = vld [vmem:[%s301 + $0x68] sm:$0xff]
        %v428 = vld [vmem:[%s301 + $0x70] sm:$0xff]
        %v429 = vld [vmem:[%s301 + $0x78] sm:$0xff]
        %v430 = vld [vmem:[%s301 + $0x80] sm:$0xff]
        %v431 = vld [vmem:[%s301 + $0x88] sm:$0xff]
        %v432 = vld [vmem:[%s301 + $0x90] sm:$0xff]
        %v433 = vld [vmem:[%s301 + $0x98] sm:$0xff]
        %v434 = vld [vmem:[%s301 + $0xa0] sm:$0xff]
        %v435 = vld [vmem:[%s301 + $0xa8] sm:$0xff]
        %v436 = vld [vmem:[%s301 + $0xb0] sm:$0xff]
        %v437 = vld [vmem:[%s301 + $0xb8] sm:$0xff]
        %v438 = vld [vmem:[%s301 + $0xc0] sm:$0xff]
        %v439 = vld [vmem:[%s301 + $0xc8] sm:$0xff]
        %v440 = vld [vmem:[%s301 + $0xd0] sm:$0xff]
        %v441 = vld [vmem:[%s301 + $0xd8] sm:$0xff]
        %v442 = vld [vmem:[%s301 + $0xe0] sm:$0xff]
        %v443 = vld [vmem:[%s301 + $0xe8] sm:$0xff]
        %v444 = vld [vmem:[%s301 + $0xf0] sm:$0xff]
        %v445 = vld [vmem:[%s301 + $0xf8] sm:$0xff]
        %v446 = vld [vmem:[%s301 + $0x100] sm:$0xff]
        %v447 = vld [vmem:[%s301 + $0x108] sm:$0xff]
        %v448 = vld [vmem:[%s301 + $0x110] sm:$0xff]
        %v449 = vld [vmem:[%s301 + $0x118] sm:$0xff]
        %v450 = vld [vmem:[%s301 + $0x120] sm:$0xff]
        %v451 = vld [vmem:[%s301 + $0x128] sm:$0xff]
        %v452 = vld [vmem:[%s301 + $0x130] sm:$0xff]
        %v453 = vld [vmem:[%s301 + $0x138] sm:$0xff]
        %v454 = vld [vmem:[%s301 + $0x140] sm:$0xff]
        %v455 = vld [vmem:[%s301 + $0x148] sm:$0xff]
        %v456 = vld [vmem:[%s301 + $0x150] sm:$0xff]
        %v457 = vld [vmem:[%s301 + $0x158] sm:$0xff]
        %v458 = vld [vmem:[%s301 + $0x160] sm:$0xff]
        %v459 = vld [vmem:[%s301 + $0x168] sm:$0xff]
        %v460 = vld [vmem:[%s301 + $0x170] sm:$0xff]
        %v461 = vld [vmem:[%s301 + $0x178] sm:$0xff]
        %v462 = vld [vmem:[%s301 + $0x180] sm:$0xff]
        %v463 = vld [vmem:[%s301 + $0x188] sm:$0xff]
        %v464 = vld [vmem:[%s301 + $0x190] sm:$0xff]
        %v465 = vld [vmem:[%s301 + $0x198] sm:$0xff]
        %v466 = vld [vmem:[%s301 + $0x1a0] sm:$0xff]
        %v467 = vld [vmem:[%s301 + $0x1a8] sm:$0xff]
        %v468 = vld [vmem:[%s301 + $0x1b0] sm:$0xff]
        %v469 = vld [vmem:[%s301 + $0x1b8] sm:$0xff]
        %v470 = vld [vmem:[%s301 + $0x1c0] sm:$0xff]
        %v471 = vld [vmem:[%s301 + $0x1c8] sm:$0xff]
        %v472 = vld [vmem:[%s301 + $0x1d0] sm:$0xff]
        %v473 = vld [vmem:[%s301 + $0x1d8] sm:$0xff]
        %v474 = vld [vmem:[%s301 + $0x1e0] sm:$0xff]
        %v475 = vld [vmem:[%s301 + $0x1e8] sm:$0xff]
        %v476 = vld [vmem:[%s301 + $0x1f0] sm:$0xff]
        %v477 = vld [vmem:[%s301 + $0x1f8] sm:$0xff]
        %v478 = vunpack.c.l.bf16 %v414
        %v479 = vunpack.c.h.bf16 %v414
        %v480 = vunpack.c.l.bf16 %v415
        %v481 = vunpack.c.h.bf16 %v415
        %v482 = vunpack.c.l.bf16 %v416
        %v483 = vunpack.c.h.bf16 %v416
        %v484 = vunpack.c.l.bf16 %v417
        %v485 = vunpack.c.h.bf16 %v417
        %v486 = vunpack.c.l.bf16 %v418
        %v487 = vunpack.c.h.bf16 %v418
        %v488 = vunpack.c.l.bf16 %v419
        %v489 = vunpack.c.h.bf16 %v419
        %v490 = vunpack.c.l.bf16 %v420
        %v491 = vunpack.c.h.bf16 %v420
        %v492 = vunpack.c.l.bf16 %v421
        %v493 = vunpack.c.h.bf16 %v421
        %v494 = vunpack.c.l.bf16 %v422
        %v495 = vunpack.c.h.bf16 %v422
        %v496 = vunpack.c.l.bf16 %v423
        %v497 = vunpack.c.h.bf16 %v423
        %v498 = vunpack.c.l.bf16 %v424
        %v499 = vunpack.c.h.bf16 %v424
        %v500 = vunpack.c.l.bf16 %v425
        %v501 = vunpack.c.h.bf16 %v425
        %v502 = vunpack.c.l.bf16 %v426
        %v503 = vunpack.c.h.bf16 %v426
        %v504 = vunpack.c.l.bf16 %v427
        %v505 = vunpack.c.h.bf16 %v427
        %v506 = vunpack.c.l.bf16 %v428
        %v507 = vunpack.c.h.bf16 %v428
        %v508 = vunpack.c.l.bf16 %v429
        %v509 = vunpack.c.h.bf16 %v429
        %v510 = vunpack.c.l.bf16 %v430
        %v511 = vunpack.c.h.bf16 %v430
        %v512 = vunpack.c.l.bf16 %v431
        %v513 = vunpack.c.h.bf16 %v431
        %v514 = vunpack.c.l.bf16 %v432
        %v515 = vunpack.c.h.bf16 %v432
        %v516 = vunpack.c.l.bf16 %v433
        %v517 = vunpack.c.h.bf16 %v433
        %v518 = vunpack.c.l.bf16 %v434
        %v519 = vunpack.c.h.bf16 %v434
        %v520 = vunpack.c.l.bf16 %v435
        %v521 = vunpack.c.h.bf16 %v435
        %v522 = vunpack.c.l.bf16 %v436
        %v523 = vunpack.c.h.bf16 %v436
        %v524 = vunpack.c.l.bf16 %v437
        %v525 = vunpack.c.h.bf16 %v437
        %v526 = vunpack.c.l.bf16 %v438
        %v527 = vunpack.c.h.bf16 %v438
        %v528 = vunpack.c.l.bf16 %v439
        %v529 = vunpack.c.h.bf16 %v439
        %v530 = vunpack.c.l.bf16 %v440
        %v531 = vunpack.c.h.bf16 %v440
        %v532 = vunpack.c.l.bf16 %v441
        %v533 = vunpack.c.h.bf16 %v441
        %v534 = vunpack.c.l.bf16 %v442
        %v535 = vunpack.c.h.bf16 %v442
        %v536 = vunpack.c.l.bf16 %v443
        %v537 = vunpack.c.h.bf16 %v443
        %v538 = vunpack.c.l.bf16 %v444
        %v539 = vunpack.c.h.bf16 %v444
        %v540 = vunpack.c.l.bf16 %v445
        %v541 = vunpack.c.h.bf16 %v445
        %v542 = vunpack.c.l.bf16 %v446
        %v543 = vunpack.c.h.bf16 %v446
        %v544 = vunpack.c.l.bf16 %v447
        %v545 = vunpack.c.h.bf16 %v447
        %v546 = vunpack.c.l.bf16 %v448
        %v547 = vunpack.c.h.bf16 %v448
        %v548 = vunpack.c.l.bf16 %v449
        %v549 = vunpack.c.h.bf16 %v449
        %v550 = vunpack.c.l.bf16 %v450
        %v551 = vunpack.c.h.bf16 %v450
        %v552 = vunpack.c.l.bf16 %v451
        %v553 = vunpack.c.h.bf16 %v451
        %v554 = vunpack.c.l.bf16 %v452
        %v555 = vunpack.c.h.bf16 %v452
        %v556 = vunpack.c.l.bf16 %v453
        %v557 = vunpack.c.h.bf16 %v453
        %v558 = vunpack.c.l.bf16 %v454
        %v559 = vunpack.c.h.bf16 %v454
        %v560 = vunpack.c.l.bf16 %v455
        %v561 = vunpack.c.h.bf16 %v455
        %v562 = vunpack.c.l.bf16 %v456
        %v563 = vunpack.c.h.bf16 %v456
        %v564 = vunpack.c.l.bf16 %v457
        %v565 = vunpack.c.h.bf16 %v457
        %v566 = vunpack.c.l.bf16 %v458
        %v567 = vunpack.c.h.bf16 %v458
        %v568 = vunpack.c.l.bf16 %v459
        %v569 = vunpack.c.h.bf16 %v459
        %v570 = vunpack.c.l.bf16 %v460
        %v571 = vunpack.c.h.bf16 %v460
        %v572 = vunpack.c.l.bf16 %v461
        %v573 = vunpack.c.h.bf16 %v461
        %v574 = vunpack.c.l.bf16 %v462
        %v575 = vunpack.c.h.bf16 %v462
        %v576 = vunpack.c.l.bf16 %v463
        %v577 = vunpack.c.h.bf16 %v463
        %v578 = vunpack.c.l.bf16 %v464
        %v579 = vunpack.c.h.bf16 %v464
        %v580 = vunpack.c.l.bf16 %v465
        %v581 = vunpack.c.h.bf16 %v465
        %v582 = vunpack.c.l.bf16 %v466
        %v583 = vunpack.c.h.bf16 %v466
        %v584 = vunpack.c.l.bf16 %v467
        %v585 = vunpack.c.h.bf16 %v467
        %v586 = vunpack.c.l.bf16 %v468
        %v587 = vunpack.c.h.bf16 %v468
        %v588 = vunpack.c.l.bf16 %v469
        %v589 = vunpack.c.h.bf16 %v469
        %v590 = vunpack.c.l.bf16 %v470
        %v591 = vunpack.c.h.bf16 %v470
        %v592 = vunpack.c.l.bf16 %v471
        %v593 = vunpack.c.h.bf16 %v471
        %v594 = vunpack.c.l.bf16 %v472
        %v595 = vunpack.c.h.bf16 %v472
        %v596 = vunpack.c.l.bf16 %v473
        %v597 = vunpack.c.h.bf16 %v473
        %v598 = vunpack.c.l.bf16 %v474
        %v599 = vunpack.c.h.bf16 %v474
        %v600 = vunpack.c.l.bf16 %v475
        %v601 = vunpack.c.h.bf16 %v475
        %v602 = vunpack.c.l.bf16 %v476
        %v603 = vunpack.c.h.bf16 %v476
        %v604 = vunpack.c.l.bf16 %v477
        %v605 = vunpack.c.h.bf16 %v477
        %s606 = smul.u32 %s29, 512
        %s607 = scalar_lea.vmem [#allocation7], %s606
        %v608 = vld [vmem:[%s607] sm:$0xff]
        %v609 = vld [vmem:[%s607 + $0x8] sm:$0xff]
        %v610 = vld [vmem:[%s607 + $0x10] sm:$0xff]
        %v611 = vld [vmem:[%s607 + $0x18] sm:$0xff]
        %v612 = vld [vmem:[%s607 + $0x20] sm:$0xff]
        %v613 = vld [vmem:[%s607 + $0x28] sm:$0xff]
        %v614 = vld [vmem:[%s607 + $0x30] sm:$0xff]
        %v615 = vld [vmem:[%s607 + $0x38] sm:$0xff]
        %v616 = vld [vmem:[%s607 + $0x40] sm:$0xff]
        %v617 = vld [vmem:[%s607 + $0x48] sm:$0xff]
        %v618 = vld [vmem:[%s607 + $0x50] sm:$0xff]
        %v619 = vld [vmem:[%s607 + $0x58] sm:$0xff]
        %v620 = vld [vmem:[%s607 + $0x60] sm:$0xff]
        %v621 = vld [vmem:[%s607 + $0x68] sm:$0xff]
        %v622 = vld [vmem:[%s607 + $0x70] sm:$0xff]
        %v623 = vld [vmem:[%s607 + $0x78] sm:$0xff]
        %v624 = vld [vmem:[%s607 + $0x80] sm:$0xff]
        %v625 = vld [vmem:[%s607 + $0x88] sm:$0xff]
        %v626 = vld [vmem:[%s607 + $0x90] sm:$0xff]
        %v627 = vld [vmem:[%s607 + $0x98] sm:$0xff]
        %v628 = vld [vmem:[%s607 + $0xa0] sm:$0xff]
        %v629 = vld [vmem:[%s607 + $0xa8] sm:$0xff]
        %v630 = vld [vmem:[%s607 + $0xb0] sm:$0xff]
        %v631 = vld [vmem:[%s607 + $0xb8] sm:$0xff]
        %v632 = vld [vmem:[%s607 + $0xc0] sm:$0xff]
        %v633 = vld [vmem:[%s607 + $0xc8] sm:$0xff]
        %v634 = vld [vmem:[%s607 + $0xd0] sm:$0xff]
        %v635 = vld [vmem:[%s607 + $0xd8] sm:$0xff]
        %v636 = vld [vmem:[%s607 + $0xe0] sm:$0xff]
        %v637 = vld [vmem:[%s607 + $0xe8] sm:$0xff]
        %v638 = vld [vmem:[%s607 + $0xf0] sm:$0xff]
        %v639 = vld [vmem:[%s607 + $0xf8] sm:$0xff]
        %v640 = vld [vmem:[%s607 + $0x100] sm:$0xff]
        %v641 = vld [vmem:[%s607 + $0x108] sm:$0xff]
        %v642 = vld [vmem:[%s607 + $0x110] sm:$0xff]
        %v643 = vld [vmem:[%s607 + $0x118] sm:$0xff]
        %v644 = vld [vmem:[%s607 + $0x120] sm:$0xff]
        %v645 = vld [vmem:[%s607 + $0x128] sm:$0xff]
        %v646 = vld [vmem:[%s607 + $0x130] sm:$0xff]
        %v647 = vld [vmem:[%s607 + $0x138] sm:$0xff]
        %v648 = vld [vmem:[%s607 + $0x140] sm:$0xff]
        %v649 = vld [vmem:[%s607 + $0x148] sm:$0xff]
        %v650 = vld [vmem:[%s607 + $0x150] sm:$0xff]
        %v651 = vld [vmem:[%s607 + $0x158] sm:$0xff]
        %v652 = vld [vmem:[%s607 + $0x160] sm:$0xff]
        %v653 = vld [vmem:[%s607 + $0x168] sm:$0xff]
        %v654 = vld [vmem:[%s607 + $0x170] sm:$0xff]
        %v655 = vld [vmem:[%s607 + $0x178] sm:$0xff]
        %v656 = vld [vmem:[%s607 + $0x180] sm:$0xff]
        %v657 = vld [vmem:[%s607 + $0x188] sm:$0xff]
        %v658 = vld [vmem:[%s607 + $0x190] sm:$0xff]
        %v659 = vld [vmem:[%s607 + $0x198] sm:$0xff]
        %v660 = vld [vmem:[%s607 + $0x1a0] sm:$0xff]
        %v661 = vld [vmem:[%s607 + $0x1a8] sm:$0xff]
        %v662 = vld [vmem:[%s607 + $0x1b0] sm:$0xff]
        %v663 = vld [vmem:[%s607 + $0x1b8] sm:$0xff]
        %v664 = vld [vmem:[%s607 + $0x1c0] sm:$0xff]
        %v665 = vld [vmem:[%s607 + $0x1c8] sm:$0xff]
        %v666 = vld [vmem:[%s607 + $0x1d0] sm:$0xff]
        %v667 = vld [vmem:[%s607 + $0x1d8] sm:$0xff]
        %v668 = vld [vmem:[%s607 + $0x1e0] sm:$0xff]
        %v669 = vld [vmem:[%s607 + $0x1e8] sm:$0xff]
        %v670 = vld [vmem:[%s607 + $0x1f0] sm:$0xff]
        %v671 = vld [vmem:[%s607 + $0x1f8] sm:$0xff]
        %v672 = vld [vmem:[#allocation2] sm:$0xff]
        %v673 = vld [vmem:[#allocation2 + $0x8] sm:$0xff]
        %v674 = vld [vmem:[#allocation2 + $0x10] sm:$0xff]
        %v675 = vld [vmem:[#allocation2 + $0x18] sm:$0xff]
        %v676 = vld [vmem:[#allocation2 + $0x20] sm:$0xff]
        %v677 = vld [vmem:[#allocation2 + $0x28] sm:$0xff]
        %v678 = vld [vmem:[#allocation2 + $0x30] sm:$0xff]
        %v679 = vld [vmem:[#allocation2 + $0x38] sm:$0xff]
        %v680 = vld [vmem:[#allocation2 + $0x40] sm:$0xff]
        %v681 = vld [vmem:[#allocation2 + $0x48] sm:$0xff]
        %v682 = vld [vmem:[#allocation2 + $0x50] sm:$0xff]
        %v683 = vld [vmem:[#allocation2 + $0x58] sm:$0xff]
        %v684 = vld [vmem:[#allocation2 + $0x60] sm:$0xff]
        %v685 = vld [vmem:[#allocation2 + $0x68] sm:$0xff]
        %v686 = vld [vmem:[#allocation2 + $0x70] sm:$0xff]
        %v687 = vld [vmem:[#allocation2 + $0x78] sm:$0xff]
        %v688 = vld [vmem:[#allocation2 + $0x80] sm:$0xff]
        %v689 = vld [vmem:[#allocation2 + $0x88] sm:$0xff]
        %v690 = vld [vmem:[#allocation2 + $0x90] sm:$0xff]
        %v691 = vld [vmem:[#allocation2 + $0x98] sm:$0xff]
        %v692 = vld [vmem:[#allocation2 + $0xa0] sm:$0xff]
        %v693 = vld [vmem:[#allocation2 + $0xa8] sm:$0xff]
        %v694 = vld [vmem:[#allocation2 + $0xb0] sm:$0xff]
        %v695 = vld [vmem:[#allocation2 + $0xb8] sm:$0xff]
        %v696 = vld [vmem:[#allocation2 + $0xc0] sm:$0xff]
        %v697 = vld [vmem:[#allocation2 + $0xc8] sm:$0xff]
        %v698 = vld [vmem:[#allocation2 + $0xd0] sm:$0xff]
        %v699 = vld [vmem:[#allocation2 + $0xd8] sm:$0xff]
        %v700 = vld [vmem:[#allocation2 + $0xe0] sm:$0xff]
        %v701 = vld [vmem:[#allocation2 + $0xe8] sm:$0xff]
        %v702 = vld [vmem:[#allocation2 + $0xf0] sm:$0xff]
        %v703 = vld [vmem:[#allocation2 + $0xf8] sm:$0xff]
        %704 = vmatprep.subr.mxu0 0.0
        %705 = vmatpush1.msra.mxu0 %v608
        %706 = vmatprep.subr.mxu0 0.0
        %707 = vmatpush1.msra.mxu0 %v609
        %708 = vmatprep.subr.mxu0 0.0
        %709 = vmatpush1.msra.mxu0 %v610
        %710 = vmatprep.subr.mxu0 0.0
        %711 = vmatpush1.msra.mxu0 %v611
        %712 = vmatprep.subr.mxu0 0.0
        %713 = vmatpush1.msra.mxu0 %v612
        %714 = vmatprep.subr.mxu0 0.0
        %715 = vmatpush1.msra.mxu0 %v613
        %716 = vmatprep.subr.mxu0 0.0
        %717 = vmatpush1.msra.mxu0 %v614
        %718 = vmatprep.subr.mxu0 0.0
        %719 = vmatpush1.msra.mxu0 %v615
        %720 = vmatprep.subr.mxu0 0.0
        %721 = vmatpush1.msra.mxu0 %v616
        %722 = vmatprep.subr.mxu0 0.0
        %723 = vmatpush1.msra.mxu0 %v617
        %724 = vmatprep.subr.mxu0 0.0
        %725 = vmatpush1.msra.mxu0 %v618
        %726 = vmatprep.subr.mxu0 0.0
        %727 = vmatpush1.msra.mxu0 %v619
        %728 = vmatprep.subr.mxu0 0.0
        %729 = vmatpush1.msra.mxu0 %v620
        %730 = vmatprep.subr.mxu0 0.0
        %731 = vmatpush1.msra.mxu0 %v621
        %732 = vmatprep.subr.mxu0 0.0
        %733 = vmatpush1.msra.mxu0 %v622
        %734 = vmatprep.subr.mxu0 0.0
        %735 = vmatpush1.msra.mxu0 %v623
        %736 = vmatprep.subr.mxu0 0.0
        %737 = vmatpush1.msra.mxu0 %v624
        %738 = vmatprep.subr.mxu0 0.0
        %739 = vmatpush1.msra.mxu0 %v625
        %740 = vmatprep.subr.mxu0 0.0
        %741 = vmatpush1.msra.mxu0 %v626
        %742 = vmatprep.subr.mxu0 0.0
        %743 = vmatpush1.msra.mxu0 %v627
        %744 = vmatprep.subr.mxu0 0.0
        %745 = vmatpush1.msra.mxu0 %v628
        %746 = vmatprep.subr.mxu0 0.0
        %747 = vmatpush1.msra.mxu0 %v629
        %748 = vmatprep.subr.mxu0 0.0
        %749 = vmatpush1.msra.mxu0 %v630
        %750 = vmatprep.subr.mxu0 0.0
        %751 = vmatpush1.msra.mxu0 %v631
        %752 = vmatprep.subr.mxu0 0.0
        %753 = vmatpush1.msra.mxu0 %v632
        %754 = vmatprep.subr.mxu0 0.0
        %755 = vmatpush1.msra.mxu0 %v633
        %756 = vmatprep.subr.mxu0 0.0
        %757 = vmatpush1.msra.mxu0 %v634
        %758 = vmatprep.subr.mxu0 0.0
        %759 = vmatpush1.msra.mxu0 %v635
        %760 = vmatprep.subr.mxu0 0.0
        %761 = vmatpush1.msra.mxu0 %v636
        %762 = vmatprep.subr.mxu0 0.0
        %763 = vmatpush1.msra.mxu0 %v637
        %764 = vmatprep.subr.mxu0 0.0
        %765 = vmatpush1.msra.mxu0 %v638
        %766 = vmatprep.subr.mxu0 0.0
        %767 = vmatpush1.msra.mxu0 %v639
        %768 = vmatprep.mubr.f32.mxu0 %v479
        %769 = vmatmul.mubr.f32.gmra.mrb[0].mxu0 %v478
        %v770 = vpop.f32.mrb[0].mxu0
        %v771 = vadd.f32 0.0, %v770
        %v772 = vpop.f32.mrb[0].mxu0
        %773 = vmatprep.mubr.f32.mxu0 %v483
        %774 = vmatmul.mubr.f32.gmra.mrb[0].mxu0 %v482
        %v775 = vpop.f32.mrb[0].mxu0
        %v776 = vadd.f32 0.0, %v775
        %v777 = vpop.f32.mrb[0].mxu0
        %778 = vmatprep.mubr.f32.mxu0 %v487
        %779 = vmatmul.mubr.f32.gmra.mrb[0].mxu0 %v486
        %v780 = vpop.f32.mrb[0].mxu0
        %v781 = vadd.f32 0.0, %v780
        %v782 = vpop.f32.mrb[0].mxu0
        %783 = vmatprep.mubr.f32.mxu0 %v491
        %784 = vmatmul.mubr.f32.gmra.mrb[0].mxu0 %v490
        %v785 = vpop.f32.mrb[0].mxu0
        %v786 = vadd.f32 0.0, %v785
        %v787 = vpop.f32.mrb[0].mxu0
        %788 = vmatprep.mubr.f32.mxu0 %v495
        %789 = vmatmul.mubr.f32.gmra.mrb[0].mxu0 %v494
        %v790 = vpop.f32.mrb[0].mxu0
        %v791 = vadd.f32 0.0, %v790
        %v792 = vpop.f32.mrb[0].mxu0
        %793 = vmatprep.mubr.f32.mxu0 %v499
        %794 = vmatmul.mubr.f32.gmra.mrb[0].mxu0 %v498
        %v795 = vpop.f32.mrb[0].mxu0
        %v796 = vadd.f32 0.0, %v795
        %v797 = vpop.f32.mrb[0].mxu0
        %798 = vmatprep.mubr.f32.mxu0 %v503
        %799 = vmatmul.mubr.f32.gmra.mrb[0].mxu0 %v502
        %v800 = vpop.f32.mrb[0].mxu0
        %v801 = vadd.f32 0.0, %v800
        %v802 = vpop.f32.mrb[0].mxu0
        %803 = vmatprep.mubr.f32.mxu0 %v507
        %804 = vmatmul.mubr.f32.gmra.mrb[0].mxu0 %v506
        %v805 = vpop.f32.mrb[0].mxu0
        %v806 = vadd.f32 0.0, %v805
        %v807 = vpop.f32.mrb[0].mxu0
        %808 = vmatprep.mubr.f32.mxu0 %v511
        %809 = vmatmul.mubr.f32.gmra.mrb[0].mxu0 %v510
        %v810 = vpop.f32.mrb[0].mxu0
        %v811 = vadd.f32 0.0, %v810
        %v812 = vpop.f32.mrb[0].mxu0
        %813 = vmatprep.mubr.f32.mxu0 %v515
        %814 = vmatmul.mubr.f32.gmra.mrb[0].mxu0 %v514
        %v815 = vpop.f32.mrb[0].mxu0
        %v816 = vadd.f32 0.0, %v815
        %v817 = vpop.f32.mrb[0].mxu0
        %818 = vmatprep.mubr.f32.mxu0 %v519
        %819 = vmatmul.mubr.f32.gmra.mrb[0].mxu0 %v518
        %v820 = vpop.f32.mrb[0].mxu0
        %v821 = vadd.f32 0.0, %v820
        %v822 = vpop.f32.mrb[0].mxu0
        %823 = vmatprep.mubr.f32.mxu0 %v523
        %824 = vmatmul.mubr.f32.gmra.mrb[0].mxu0 %v522
        %v825 = vpop.f32.mrb[0].mxu0
        %v826 = vadd.f32 0.0, %v825
        %v827 = vpop.f32.mrb[0].mxu0
        %828 = vmatprep.mubr.f32.mxu0 %v527
        %829 = vmatmul.mubr.f32.gmra.mrb[0].mxu0 %v526
        %v830 = vpop.f32.mrb[0].mxu0
        %v831 = vadd.f32 0.0, %v830
        %v832 = vpop.f32.mrb[0].mxu0
        %833 = vmatprep.mubr.f32.mxu0 %v531
        %834 = vmatmul.mubr.f32.gmra.mrb[0].mxu0 %v530
        %v835 = vpop.f32.mrb[0].mxu0
        %v836 = vadd.f32 0.0, %v835
        %v837 = vpop.f32.mrb[0].mxu0
        %838 = vmatprep.mubr.f32.mxu0 %v535
        %839 = vmatmul.mubr.f32.gmra.mrb[0].mxu0 %v534
        %v840 = vpop.f32.mrb[0].mxu0
        %v841 = vadd.f32 0.0, %v840
        %v842 = vpop.f32.mrb[0].mxu0
        %843 = vmatprep.mubr.f32.mxu0 %v539
        %844 = vmatmul.mubr.f32.gmra.mrb[0].mxu0 %v538
        %v845 = vpop.f32.mrb[0].mxu0
        %v846 = vadd.f32 0.0, %v845
        %v847 = vpop.f32.mrb[0].mxu0
        %848 = vmatprep.mubr.f32.mxu0 %v543
        %849 = vmatmul.mubr.f32.gmra.mrb[0].mxu0 %v542
        %v850 = vpop.f32.mrb[0].mxu0
        %v851 = vadd.f32 0.0, %v850
        %v852 = vpop.f32.mrb[0].mxu0
        %853 = vmatprep.mubr.f32.mxu0 %v547
        %854 = vmatmul.mubr.f32.gmra.mrb[0].mxu0 %v546
        %v855 = vpop.f32.mrb[0].mxu0
        %v856 = vadd.f32 0.0, %v855
        %v857 = vpop.f32.mrb[0].mxu0
        %858 = vmatprep.mubr.f32.mxu0 %v551
        %859 = vmatmul.mubr.f32.gmra.mrb[0].mxu0 %v550
        %v860 = vpop.f32.mrb[0].mxu0
        %v861 = vadd.f32 0.0, %v860
        %v862 = vpop.f32.mrb[0].mxu0
        %863 = vmatprep.mubr.f32.mxu0 %v555
        %864 = vmatmul.mubr.f32.gmra.mrb[0].mxu0 %v554
        %v865 = vpop.f32.mrb[0].mxu0
        %v866 = vadd.f32 0.0, %v865
        %v867 = vpop.f32.mrb[0].mxu0
        %868 = vmatprep.mubr.f32.mxu0 %v559
        %869 = vmatmul.mubr.f32.gmra.mrb[0].mxu0 %v558
        %v870 = vpop.f32.mrb[0].mxu0
        %v871 = vadd.f32 0.0, %v870
        %v872 = vpop.f32.mrb[0].mxu0
        %873 = vmatprep.mubr.f32.mxu0 %v563
        %874 = vmatmul.mubr.f32.gmra.mrb[0].mxu0 %v562
        %v875 = vpop.f32.mrb[0].mxu0
        %v876 = vadd.f32 0.0, %v875
        %v877 = vpop.f32.mrb[0].mxu0
        %878 = vmatprep.mubr.f32.mxu0 %v567
        %879 = vmatmul.mubr.f32.gmra.mrb[0].mxu0 %v566
        %v880 = vpop.f32.mrb[0].mxu0
        %v881 = vadd.f32 0.0, %v880
        %v882 = vpop.f32.mrb[0].mxu0
        %883 = vmatprep.mubr.f32.mxu0 %v571
        %884 = vmatmul.mubr.f32.gmra.mrb[0].mxu0 %v570
        %v885 = vpop.f32.mrb[0].mxu0
        %v886 = vadd.f32 0.0, %v885
        %v887 = vpop.f32.mrb[0].mxu0
        %888 = vmatprep.mubr.f32.mxu0 %v575
        %889 = vmatmul.mubr.f32.gmra.mrb[0].mxu0 %v574
        %v890 = vpop.f32.mrb[0].mxu0
        %v891 = vadd.f32 0.0, %v890
        %v892 = vpop.f32.mrb[0].mxu0
        %893 = vmatprep.mubr.f32.mxu0 %v579
        %894 = vmatmul.mubr.f32.gmra.mrb[0].mxu0 %v578
        %v895 = vpop.f32.mrb[0].mxu0
        %v896 = vadd.f32 0.0, %v895
        %v897 = vpop.f32.mrb[0].mxu0
        %898 = vmatprep.mubr.f32.mxu0 %v583
        %899 = vmatmul.mubr.f32.gmra.mrb[0].mxu0 %v582
        %v900 = vpop.f32.mrb[0].mxu0
        %v901 = vadd.f32 0.0, %v900
        %v902 = vpop.f32.mrb[0].mxu0
        %903 = vmatprep.mubr.f32.mxu0 %v587
        %904 = vmatmul.mubr.f32.gmra.mrb[0].mxu0 %v586
        %v905 = vpop.f32.mrb[0].mxu0
        %v906 = vadd.f32 0.0, %v905
        %v907 = vpop.f32.mrb[0].mxu0
        %908 = vmatprep.mubr.f32.mxu0 %v591
        %909 = vmatmul.mubr.f32.gmra.mrb[0].mxu0 %v590
        %v910 = vpop.f32.mrb[0].mxu0
        %v911 = vadd.f32 0.0, %v910
        %v912 = vpop.f32.mrb[0].mxu0
        %913 = vmatprep.mubr.f32.mxu0 %v595
        %914 = vmatmul.mubr.f32.gmra.mrb[0].mxu0 %v594
        %v915 = vpop.f32.mrb[0].mxu0
        %v916 = vadd.f32 0.0, %v915
        %v917 = vpop.f32.mrb[0].mxu0
        %918 = vmatprep.mubr.f32.mxu0 %v599
        %919 = vmatmul.mubr.f32.gmra.mrb[0].mxu0 %v598
        %v920 = vpop.f32.mrb[0].mxu0
        %v921 = vadd.f32 0.0, %v920
        %v922 = vpop.f32.mrb[0].mxu0
        %923 = vmatprep.mubr.f32.mxu0 %v603
        %924 = vmatmul.mubr.f32.gmra.mrb[0].mxu0 %v602
        %v925 = vpop.f32.mrb[0].mxu0
        %v926 = vadd.f32 0.0, %v925
        %v927 = vpop.f32.mrb[0].mxu0
        %928 = vdwg.mxu0
        %929 = vmatprep.subr.mxu0 0.0
        %930 = vmatpush1.msra.mxu0 %v640
        %931 = vmatprep.subr.mxu0 0.0
        %932 = vmatpush1.msra.mxu0 %v641
        %933 = vmatprep.subr.mxu0 0.0
        %934 = vmatpush1.msra.mxu0 %v642
        %935 = vmatprep.subr.mxu0 0.0
        %936 = vmatpush1.msra.mxu0 %v643
        %937 = vmatprep.subr.mxu0 0.0
        %938 = vmatpush1.msra.mxu0 %v644
        %939 = vmatprep.subr.mxu0 0.0
        %940 = vmatpush1.msra.mxu0 %v645
        %941 = vmatprep.subr.mxu0 0.0
        %942 = vmatpush1.msra.mxu0 %v646
        %943 = vmatprep.subr.mxu0 0.0
        %944 = vmatpush1.msra.mxu0 %v647
        %945 = vmatprep.subr.mxu0 0.0
        %946 = vmatpush1.msra.mxu0 %v648
        %947 = vmatprep.subr.mxu0 0.0
        %948 = vmatpush1.msra.mxu0 %v649
        %949 = vmatprep.subr.mxu0 0.0
        %950 = vmatpush1.msra.mxu0 %v650
        %951 = vmatprep.subr.mxu0 0.0
        %952 = vmatpush1.msra.mxu0 %v651
        %953 = vmatprep.subr.mxu0 0.0
        %954 = vmatpush1.msra.mxu0 %v652
        %955 = vmatprep.subr.mxu0 0.0
        %956 = vmatpush1.msra.mxu0 %v653
        %957 = vmatprep.subr.mxu0 0.0
        %958 = vmatpush1.msra.mxu0 %v654
        %959 = vmatprep.subr.mxu0 0.0
        %960 = vmatpush1.msra.mxu0 %v655
        %961 = vmatprep.subr.mxu0 0.0
        %962 = vmatpush1.msra.mxu0 %v656
        %963 = vmatprep.subr.mxu0 0.0
        %964 = vmatpush1.msra.mxu0 %v657
        %965 = vmatprep.subr.mxu0 0.0
        %966 = vmatpush1.msra.mxu0 %v658
        %967 = vmatprep.subr.mxu0 0.0
        %968 = vmatpush1.msra.mxu0 %v659
        %969 = vmatprep.subr.mxu0 0.0
        %970 = vmatpush1.msra.mxu0 %v660
        %971 = vmatprep.subr.mxu0 0.0
        %972 = vmatpush1.msra.mxu0 %v661
        %973 = vmatprep.subr.mxu0 0.0
        %974 = vmatpush1.msra.mxu0 %v662
        %975 = vmatprep.subr.mxu0 0.0
        %976 = vmatpush1.msra.mxu0 %v663
        %977 = vmatprep.subr.mxu0 0.0
        %978 = vmatpush1.msra.mxu0 %v664
        %979 = vmatprep.subr.mxu0 0.0
        %980 = vmatpush1.msra.mxu0 %v665
        %981 = vmatprep.subr.mxu0 0.0
        %982 = vmatpush1.msra.mxu0 %v666
        %983 = vmatprep.subr.mxu0 0.0
        %984 = vmatpush1.msra.mxu0 %v667
        %985 = vmatprep.subr.mxu0 0.0
        %986 = vmatpush1.msra.mxu0 %v668
        %987 = vmatprep.subr.mxu0 0.0
        %988 = vmatpush1.msra.mxu0 %v669
        %989 = vmatprep.subr.mxu0 0.0
        %990 = vmatpush1.msra.mxu0 %v670
        %991 = vmatprep.subr.mxu0 0.0
        %992 = vmatpush1.msra.mxu0 %v671
        %993 = vmatprep.mubr.f32.mxu0 %v481
        %994 = vmatmul.mubr.f32.gmra.mrb[0].mxu0 %v480
        %v995 = vpop.f32.mrb[0].mxu0
        %v996 = vadd.f32 %v771, %v995
        %v997 = vpop.f32.mrb[0].mxu0
        %998 = vmatprep.mubr.f32.mxu0 %v485
        %999 = vmatmul.mubr.f32.gmra.mrb[0].mxu0 %v484
        %v1000 = vpop.f32.mrb[0].mxu0
        %v1001 = vadd.f32 %v776, %v1000
        %v1002 = vpop.f32.mrb[0].mxu0
        %1003 = vmatprep.mubr.f32.mxu0 %v489
        %1004 = vmatmul.mubr.f32.gmra.mrb[0].mxu0 %v488
        %v1005 = vpop.f32.mrb[0].mxu0
        %v1006 = vadd.f32 %v781, %v1005
        %v1007 = vpop.f32.mrb[0].mxu0
        %1008 = vmatprep.mubr.f32.mxu0 %v493
        %1009 = vmatmul.mubr.f32.gmra.mrb[0].mxu0 %v492
        %v1010 = vpop.f32.mrb[0].mxu0
        %v1011 = vadd.f32 %v786, %v1010
        %v1012 = vpop.f32.mrb[0].mxu0
        %1013 = vmatprep.mubr.f32.mxu0 %v497
        %1014 = vmatmul.mubr.f32.gmra.mrb[0].mxu0 %v496
        %v1015 = vpop.f32.mrb[0].mxu0
        %v1016 = vadd.f32 %v791, %v1015
        %v1017 = vpop.f32.mrb[0].mxu0
        %1018 = vmatprep.mubr.f32.mxu0 %v501
        %1019 = vmatmul.mubr.f32.gmra.mrb[0].mxu0 %v500
        %v1020 = vpop.f32.mrb[0].mxu0
        %v1021 = vadd.f32 %v796, %v1020
        %v1022 = vpop.f32.mrb[0].mxu0
        %1023 = vmatprep.mubr.f32.mxu0 %v505
        %1024 = vmatmul.mubr.f32.gmra.mrb[0].mxu0 %v504
        %v1025 = vpop.f32.mrb[0].mxu0
        %v1026 = vadd.f32 %v801, %v1025
        %v1027 = vpop.f32.mrb[0].mxu0
        %1028 = vmatprep.mubr.f32.mxu0 %v509
        %1029 = vmatmul.mubr.f32.gmra.mrb[0].mxu0 %v508
        %v1030 = vpop.f32.mrb[0].mxu0
        %v1031 = vadd.f32 %v806, %v1030
        %v1032 = vpop.f32.mrb[0].mxu0
        %1033 = vmatprep.mubr.f32.mxu0 %v513
        %1034 = vmatmul.mubr.f32.gmra.mrb[0].mxu0 %v512
        %v1035 = vpop.f32.mrb[0].mxu0
        %v1036 = vadd.f32 %v811, %v1035
        %v1037 = vpop.f32.mrb[0].mxu0
        %1038 = vmatprep.mubr.f32.mxu0 %v517
        %1039 = vmatmul.mubr.f32.gmra.mrb[0].mxu0 %v516
        %v1040 = vpop.f32.mrb[0].mxu0
        %v1041 = vadd.f32 %v816, %v1040
        %v1042 = vpop.f32.mrb[0].mxu0
        %1043 = vmatprep.mubr.f32.mxu0 %v521
        %1044 = vmatmul.mubr.f32.gmra.mrb[0].mxu0 %v520
        %v1045 = vpop.f32.mrb[0].mxu0
        %v1046 = vadd.f32 %v821, %v1045
        %v1047 = vpop.f32.mrb[0].mxu0
        %1048 = vmatprep.mubr.f32.mxu0 %v525
        %1049 = vmatmul.mubr.f32.gmra.mrb[0].mxu0 %v524
        %v1050 = vpop.f32.mrb[0].mxu0
        %v1051 = vadd.f32 %v826, %v1050
        %v1052 = vpop.f32.mrb[0].mxu0
        %1053 = vmatprep.mubr.f32.mxu0 %v529
        %1054 = vmatmul.mubr.f32.gmra.mrb[0].mxu0 %v528
        %v1055 = vpop.f32.mrb[0].mxu0
        %v1056 = vadd.f32 %v831, %v1055
        %v1057 = vpop.f32.mrb[0].mxu0
        %1058 = vmatprep.mubr.f32.mxu0 %v533
        %1059 = vmatmul.mubr.f32.gmra.mrb[0].mxu0 %v532
        %v1060 = vpop.f32.mrb[0].mxu0
        %v1061 = vadd.f32 %v836, %v1060
        %v1062 = vpop.f32.mrb[0].mxu0
        %1063 = vmatprep.mubr.f32.mxu0 %v537
        %1064 = vmatmul.mubr.f32.gmra.mrb[0].mxu0 %v536
        %v1065 = vpop.f32.mrb[0].mxu0
        %v1066 = vadd.f32 %v841, %v1065
        %v1067 = vpop.f32.mrb[0].mxu0
        %1068 = vmatprep.mubr.f32.mxu0 %v541
        %1069 = vmatmul.mubr.f32.gmra.mrb[0].mxu0 %v540
        %v1070 = vpop.f32.mrb[0].mxu0
        %v1071 = vadd.f32 %v846, %v1070
        %v1072 = vpop.f32.mrb[0].mxu0
        %1073 = vmatprep.mubr.f32.mxu0 %v545
        %1074 = vmatmul.mubr.f32.gmra.mrb[0].mxu0 %v544
        %v1075 = vpop.f32.mrb[0].mxu0
        %v1076 = vadd.f32 %v851, %v1075
        %v1077 = vpop.f32.mrb[0].mxu0
        %1078 = vmatprep.mubr.f32.mxu0 %v549
        %1079 = vmatmul.mubr.f32.gmra.mrb[0].mxu0 %v548
        %v1080 = vpop.f32.mrb[0].mxu0
        %v1081 = vadd.f32 %v856, %v1080
        %v1082 = vpop.f32.mrb[0].mxu0
        %1083 = vmatprep.mubr.f32.mxu0 %v553
        %1084 = vmatmul.mubr.f32.gmra.mrb[0].mxu0 %v552
        %v1085 = vpop.f32.mrb[0].mxu0
        %v1086 = vadd.f32 %v861, %v1085
        %v1087 = vpop.f32.mrb[0].mxu0
        %1088 = vmatprep.mubr.f32.mxu0 %v557
        %1089 = vmatmul.mubr.f32.gmra.mrb[0].mxu0 %v556
        %v1090 = vpop.f32.mrb[0].mxu0
        %v1091 = vadd.f32 %v866, %v1090
        %v1092 = vpop.f32.mrb[0].mxu0
        %1093 = vmatprep.mubr.f32.mxu0 %v561
        %1094 = vmatmul.mubr.f32.gmra.mrb[0].mxu0 %v560
        %v1095 = vpop.f32.mrb[0].mxu0
        %v1096 = vadd.f32 %v871, %v1095
        %v1097 = vpop.f32.mrb[0].mxu0
        %1098 = vmatprep.mubr.f32.mxu0 %v565
        %1099 = vmatmul.mubr.f32.gmra.mrb[0].mxu0 %v564
        %v1100 = vpop.f32.mrb[0].mxu0
        %v1101 = vadd.f32 %v876, %v1100
        %v1102 = vpop.f32.mrb[0].mxu0
        %1103 = vmatprep.mubr.f32.mxu0 %v569
        %1104 = vmatmul.mubr.f32.gmra.mrb[0].mxu0 %v568
        %v1105 = vpop.f32.mrb[0].mxu0
        %v1106 = vadd.f32 %v881, %v1105
        %v1107 = vpop.f32.mrb[0].mxu0
        %1108 = vmatprep.mubr.f32.mxu0 %v573
        %1109 = vmatmul.mubr.f32.gmra.mrb[0].mxu0 %v572
        %v1110 = vpop.f32.mrb[0].mxu0
        %v1111 = vadd.f32 %v886, %v1110
        %v1112 = vpop.f32.mrb[0].mxu0
        %1113 = vmatprep.mubr.f32.mxu0 %v577
        %1114 = vmatmul.mubr.f32.gmra.mrb[0].mxu0 %v576
        %v1115 = vpop.f32.mrb[0].mxu0
        %v1116 = vadd.f32 %v891, %v1115
        %v1117 = vpop.f32.mrb[0].mxu0
        %1118 = vmatprep.mubr.f32.mxu0 %v581
        %1119 = vmatmul.mubr.f32.gmra.mrb[0].mxu0 %v580
        %v1120 = vpop.f32.mrb[0].mxu0
        %v1121 = vadd.f32 %v896, %v1120
        %v1122 = vpop.f32.mrb[0].mxu0
        %1123 = vmatprep.mubr.f32.mxu0 %v585
        %1124 = vmatmul.mubr.f32.gmra.mrb[0].mxu0 %v584
        %v1125 = vpop.f32.mrb[0].mxu0
        %v1126 = vadd.f32 %v901, %v1125
        %v1127 = vpop.f32.mrb[0].mxu0
        %1128 = vmatprep.mubr.f32.mxu0 %v589
        %1129 = vmatmul.mubr.f32.gmra.mrb[0].mxu0 %v588
        %v1130 = vpop.f32.mrb[0].mxu0
        %v1131 = vadd.f32 %v906, %v1130
        %v1132 = vpop.f32.mrb[0].mxu0
        %1133 = vmatprep.mubr.f32.mxu0 %v593
        %1134 = vmatmul.mubr.f32.gmra.mrb[0].mxu0 %v592
        %v1135 = vpop.f32.mrb[0].mxu0
        %v1136 = vadd.f32 %v911, %v1135
        %v1137 = vpop.f32.mrb[0].mxu0
        %1138 = vmatprep.mubr.f32.mxu0 %v597
        %1139 = vmatmul.mubr.f32.gmra.mrb[0].mxu0 %v596
        %v1140 = vpop.f32.mrb[0].mxu0
        %v1141 = vadd.f32 %v916, %v1140
        %v1142 = vpop.f32.mrb[0].mxu0
        %1143 = vmatprep.mubr.f32.mxu0 %v601
        %1144 = vmatmul.mubr.f32.gmra.mrb[0].mxu0 %v600
        %v1145 = vpop.f32.mrb[0].mxu0
        %v1146 = vadd.f32 %v921, %v1145
        %v1147 = vpop.f32.mrb[0].mxu0
        %1148 = vmatprep.mubr.f32.mxu0 %v605
        %1149 = vmatmul.mubr.f32.gmra.mrb[0].mxu0 %v604
        %v1150 = vpop.f32.mrb[0].mxu0
        %v1151 = vadd.f32 %v926, %v1150
        %v1152 = vpop.f32.mrb[0].mxu0
        %1153 = vdwg.mxu0
        %v1154 = vadd.f32 %v672, %v996
        %v1155 = vadd.f32 %v673, %v1001
        %v1156 = vadd.f32 %v674, %v1006
        %v1157 = vadd.f32 %v675, %v1011
        %v1158 = vadd.f32 %v676, %v1016
        %v1159 = vadd.f32 %v677, %v1021
        %v1160 = vadd.f32 %v678, %v1026
        %v1161 = vadd.f32 %v679, %v1031
        %v1162 = vadd.f32 %v680, %v1036
        %v1163 = vadd.f32 %v681, %v1041
        %v1164 = vadd.f32 %v682, %v1046
        %v1165 = vadd.f32 %v683, %v1051
        %v1166 = vadd.f32 %v684, %v1056
        %v1167 = vadd.f32 %v685, %v1061
        %v1168 = vadd.f32 %v686, %v1066
        %v1169 = vadd.f32 %v687, %v1071
        %v1170 = vadd.f32 %v688, %v1076
        %v1171 = vadd.f32 %v689, %v1081
        %v1172 = vadd.f32 %v690, %v1086
        %v1173 = vadd.f32 %v691, %v1091
        %v1174 = vadd.f32 %v692, %v1096
        %v1175 = vadd.f32 %v693, %v1101
        %v1176 = vadd.f32 %v694, %v1106
        %v1177 = vadd.f32 %v695, %v1111
        %v1178 = vadd.f32 %v696, %v1116
        %v1179 = vadd.f32 %v697, %v1121
        %v1180 = vadd.f32 %v698, %v1126
        %v1181 = vadd.f32 %v699, %v1131
        %v1182 = vadd.f32 %v700, %v1136
        %v1183 = vadd.f32 %v701, %v1141
        %v1184 = vadd.f32 %v702, %v1146
        %v1185 = vadd.f32 %v703, %v1151
        %1186 = vst [vmem:[#allocation2] sm:$0xff] %v1154
        %1187 = vst [vmem:[#allocation2 + $0x8] sm:$0xff] %v1155
        %1188 = vst [vmem:[#allocation2 + $0x10] sm:$0xff] %v1156
        %1189 = vst [vmem:[#allocation2 + $0x18] sm:$0xff] %v1157
        %1190 = vst [vmem:[#allocation2 + $0x20] sm:$0xff] %v1158
        %1191 = vst [vmem:[#allocation2 + $0x28] sm:$0xff] %v1159
        %1192 = vst [vmem:[#allocation2 + $0x30] sm:$0xff] %v1160
        %1193 = vst [vmem:[#allocation2 + $0x38] sm:$0xff] %v1161
        %1194 = vst [vmem:[#allocation2 + $0x40] sm:$0xff] %v1162
        %1195 = vst [vmem:[#allocation2 + $0x48] sm:$0xff] %v1163
        %1196 = vst [vmem:[#allocation2 + $0x50] sm:$0xff] %v1164
        %1197 = vst [vmem:[#allocation2 + $0x58] sm:$0xff] %v1165
        %1198 = vst [vmem:[#allocation2 + $0x60] sm:$0xff] %v1166
        %1199 = vst [vmem:[#allocation2 + $0x68] sm:$0xff] %v1167
        %1200 = vst [vmem:[#allocation2 + $0x70] sm:$0xff] %v1168
        %1201 = vst [vmem:[#allocation2 + $0x78] sm:$0xff] %v1169
        %1202 = vst [vmem:[#allocation2 + $0x80] sm:$0xff] %v1170
        %1203 = vst [vmem:[#allocation2 + $0x88] sm:$0xff] %v1171
        %1204 = vst [vmem:[#allocation2 + $0x90] sm:$0xff] %v1172
        %1205 = vst [vmem:[#allocation2 + $0x98] sm:$0xff] %v1173
        %1206 = vst [vmem:[#allocation2 + $0xa0] sm:$0xff] %v1174
        %1207 = vst [vmem:[#allocation2 + $0xa8] sm:$0xff] %v1175
        %1208 = vst [vmem:[#allocation2 + $0xb0] sm:$0xff] %v1176
        %1209 = vst [vmem:[#allocation2 + $0xb8] sm:$0xff] %v1177
        %1210 = vst [vmem:[#allocation2 + $0xc0] sm:$0xff] %v1178
        %1211 = vst [vmem:[#allocation2 + $0xc8] sm:$0xff] %v1179
        %1212 = vst [vmem:[#allocation2 + $0xd0] sm:$0xff] %v1180
        %1213 = vst [vmem:[#allocation2 + $0xd8] sm:$0xff] %v1181
        %1214 = vst [vmem:[#allocation2 + $0xe0] sm:$0xff] %v1182
        %1215 = vst [vmem:[#allocation2 + $0xe8] sm:$0xff] %v1183
        %1216 = vst [vmem:[#allocation2 + $0xf0] sm:$0xff] %v1184
        %1217 = vst [vmem:[#allocation2 + $0xf8] sm:$0xff] %v1185
        %v1218 = vld [vmem:[#allocation3] sm:$0xff]
        %v1219 = vld [vmem:[#allocation3 + $0x8] sm:$0xff]
        %v1220 = vld [vmem:[#allocation3 + $0x10] sm:$0xff]
        %v1221 = vld [vmem:[#allocation3 + $0x18] sm:$0xff]
        %v1222 = vld [vmem:[#allocation3 + $0x20] sm:$0xff]
        %v1223 = vld [vmem:[#allocation3 + $0x28] sm:$0xff]
        %v1224 = vld [vmem:[#allocation3 + $0x30] sm:$0xff]
        %v1225 = vld [vmem:[#allocation3 + $0x38] sm:$0xff]
        %v1226 = vld [vmem:[#allocation3 + $0x40] sm:$0xff]
        %v1227 = vld [vmem:[#allocation3 + $0x48] sm:$0xff]
        %v1228 = vld [vmem:[#allocation3 + $0x50] sm:$0xff]
        %v1229 = vld [vmem:[#allocation3 + $0x58] sm:$0xff]
        %v1230 = vld [vmem:[#allocation3 + $0x60] sm:$0xff]
        %v1231 = vld [vmem:[#allocation3 + $0x68] sm:$0xff]
        %v1232 = vld [vmem:[#allocation3 + $0x70] sm:$0xff]
        %v1233 = vld [vmem:[#allocation3 + $0x78] sm:$0xff]
        %v1234 = vld [vmem:[#allocation3 + $0x80] sm:$0xff]
        %v1235 = vld [vmem:[#allocation3 + $0x88] sm:$0xff]
        %v1236 = vld [vmem:[#allocation3 + $0x90] sm:$0xff]
        %v1237 = vld [vmem:[#allocation3 + $0x98] sm:$0xff]
        %v1238 = vld [vmem:[#allocation3 + $0xa0] sm:$0xff]
        %v1239 = vld [vmem:[#allocation3 + $0xa8] sm:$0xff]
        %v1240 = vld [vmem:[#allocation3 + $0xb0] sm:$0xff]
        %v1241 = vld [vmem:[#allocation3 + $0xb8] sm:$0xff]
        %v1242 = vld [vmem:[#allocation3 + $0xc0] sm:$0xff]
        %v1243 = vld [vmem:[#allocation3 + $0xc8] sm:$0xff]
        %v1244 = vld [vmem:[#allocation3 + $0xd0] sm:$0xff]
        %v1245 = vld [vmem:[#allocation3 + $0xd8] sm:$0xff]
        %v1246 = vld [vmem:[#allocation3 + $0xe0] sm:$0xff]
        %v1247 = vld [vmem:[#allocation3 + $0xe8] sm:$0xff]
        %v1248 = vld [vmem:[#allocation3 + $0xf0] sm:$0xff]
        %v1249 = vld [vmem:[#allocation3 + $0xf8] sm:$0xff]
        %v1250 = vadd.f32 %v478, %v479
        %v1251 = vadd.f32 %v1250, %v480
        %v1252 = vadd.f32 %v1251, %v481
        %1253 = vadd.xlane.f32.xlu0 %v1252
        %v1254 = vpop.xlane.xlu0 %1253
        %v1255 = vadd.f32 %v482, %v483
        %v1256 = vadd.f32 %v1255, %v484
        %v1257 = vadd.f32 %v1256, %v485
        %1258 = vadd.xlane.f32.xlu0 %v1257
        %v1259 = vpop.xlane.xlu0 %1258
        %v1260 = vadd.f32 %v486, %v487
        %v1261 = vadd.f32 %v1260, %v488
        %v1262 = vadd.f32 %v1261, %v489
        %1263 = vadd.xlane.f32.xlu0 %v1262
        %v1264 = vpop.xlane.xlu0 %1263
        %v1265 = vadd.f32 %v490, %v491
        %v1266 = vadd.f32 %v1265, %v492
        %v1267 = vadd.f32 %v1266, %v493
        %1268 = vadd.xlane.f32.xlu0 %v1267
        %v1269 = vpop.xlane.xlu0 %1268
        %v1270 = vadd.f32 %v494, %v495
        %v1271 = vadd.f32 %v1270, %v496
        %v1272 = vadd.f32 %v1271, %v497
        %1273 = vadd.xlane.f32.xlu0 %v1272
        %v1274 = vpop.xlane.xlu0 %1273
        %v1275 = vadd.f32 %v498, %v499
        %v1276 = vadd.f32 %v1275, %v500
        %v1277 = vadd.f32 %v1276, %v501
        %1278 = vadd.xlane.f32.xlu0 %v1277
        %v1279 = vpop.xlane.xlu0 %1278
        %v1280 = vadd.f32 %v502, %v503
        %v1281 = vadd.f32 %v1280, %v504
        %v1282 = vadd.f32 %v1281, %v505
        %1283 = vadd.xlane.f32.xlu0 %v1282
        %v1284 = vpop.xlane.xlu0 %1283
        %v1285 = vadd.f32 %v506, %v507
        %v1286 = vadd.f32 %v1285, %v508
        %v1287 = vadd.f32 %v1286, %v509
        %1288 = vadd.xlane.f32.xlu0 %v1287
        %v1289 = vpop.xlane.xlu0 %1288
        %v1290 = vadd.f32 %v510, %v511
        %v1291 = vadd.f32 %v1290, %v512
        %v1292 = vadd.f32 %v1291, %v513
        %1293 = vadd.xlane.f32.xlu0 %v1292
        %v1294 = vpop.xlane.xlu0 %1293
        %v1295 = vadd.f32 %v514, %v515
        %v1296 = vadd.f32 %v1295, %v516
        %v1297 = vadd.f32 %v1296, %v517
        %1298 = vadd.xlane.f32.xlu0 %v1297
        %v1299 = vpop.xlane.xlu0 %1298
        %v1300 = vadd.f32 %v518, %v519
        %v1301 = vadd.f32 %v1300, %v520
        %v1302 = vadd.f32 %v1301, %v521
        %1303 = vadd.xlane.f32.xlu0 %v1302
        %v1304 = vpop.xlane.xlu0 %1303
        %v1305 = vadd.f32 %v522, %v523
        %v1306 = vadd.f32 %v1305, %v524
        %v1307 = vadd.f32 %v1306, %v525
        %1308 = vadd.xlane.f32.xlu0 %v1307
        %v1309 = vpop.xlane.xlu0 %1308
        %v1310 = vadd.f32 %v526, %v527
        %v1311 = vadd.f32 %v1310, %v528
        %v1312 = vadd.f32 %v1311, %v529
        %1313 = vadd.xlane.f32.xlu0 %v1312
        %v1314 = vpop.xlane.xlu0 %1313
        %v1315 = vadd.f32 %v530, %v531
        %v1316 = vadd.f32 %v1315, %v532
        %v1317 = vadd.f32 %v1316, %v533
        %1318 = vadd.xlane.f32.xlu0 %v1317
        %v1319 = vpop.xlane.xlu0 %1318
        %v1320 = vadd.f32 %v534, %v535
        %v1321 = vadd.f32 %v1320, %v536
        %v1322 = vadd.f32 %v1321, %v537
        %1323 = vadd.xlane.f32.xlu0 %v1322
        %v1324 = vpop.xlane.xlu0 %1323
        %v1325 = vadd.f32 %v538, %v539
        %v1326 = vadd.f32 %v1325, %v540
        %v1327 = vadd.f32 %v1326, %v541
        %1328 = vadd.xlane.f32.xlu0 %v1327
        %v1329 = vpop.xlane.xlu0 %1328
        %v1330 = vadd.f32 %v542, %v543
        %v1331 = vadd.f32 %v1330, %v544
        %v1332 = vadd.f32 %v1331, %v545
        %1333 = vadd.xlane.f32.xlu0 %v1332
        %v1334 = vpop.xlane.xlu0 %1333
        %v1335 = vadd.f32 %v546, %v547
        %v1336 = vadd.f32 %v1335, %v548
        %v1337 = vadd.f32 %v1336, %v549
        %1338 = vadd.xlane.f32.xlu0 %v1337
        %v1339 = vpop.xlane.xlu0 %1338
        %v1340 = vadd.f32 %v550, %v551
        %v1341 = vadd.f32 %v1340, %v552
        %v1342 = vadd.f32 %v1341, %v553
        %1343 = vadd.xlane.f32.xlu0 %v1342
        %v1344 = vpop.xlane.xlu0 %1343
        %v1345 = vadd.f32 %v554, %v555
        %v1346 = vadd.f32 %v1345, %v556
        %v1347 = vadd.f32 %v1346, %v557
        %1348 = vadd.xlane.f32.xlu0 %v1347
        %v1349 = vpop.xlane.xlu0 %1348
        %v1350 = vadd.f32 %v558, %v559
        %v1351 = vadd.f32 %v1350, %v560
        %v1352 = vadd.f32 %v1351, %v561
        %1353 = vadd.xlane.f32.xlu0 %v1352
        %v1354 = vpop.xlane.xlu0 %1353
        %v1355 = vadd.f32 %v562, %v563
        %v1356 = vadd.f32 %v1355, %v564
        %v1357 = vadd.f32 %v1356, %v565
        %1358 = vadd.xlane.f32.xlu0 %v1357
        %v1359 = vpop.xlane.xlu0 %1358
        %v1360 = vadd.f32 %v566, %v567
        %v1361 = vadd.f32 %v1360, %v568
        %v1362 = vadd.f32 %v1361, %v569
        %1363 = vadd.xlane.f32.xlu0 %v1362
        %v1364 = vpop.xlane.xlu0 %1363
        %v1365 = vadd.f32 %v570, %v571
        %v1366 = vadd.f32 %v1365, %v572
        %v1367 = vadd.f32 %v1366, %v573
        %1368 = vadd.xlane.f32.xlu0 %v1367
        %v1369 = vpop.xlane.xlu0 %1368
        %v1370 = vadd.f32 %v574, %v575
        %v1371 = vadd.f32 %v1370, %v576
        %v1372 = vadd.f32 %v1371, %v577
        %1373 = vadd.xlane.f32.xlu0 %v1372
        %v1374 = vpop.xlane.xlu0 %1373
        %v1375 = vadd.f32 %v578, %v579
        %v1376 = vadd.f32 %v1375, %v580
        %v1377 = vadd.f32 %v1376, %v581
        %1378 = vadd.xlane.f32.xlu0 %v1377
        %v1379 = vpop.xlane.xlu0 %1378
        %v1380 = vadd.f32 %v582, %v583
        %v1381 = vadd.f32 %v1380, %v584
        %v1382 = vadd.f32 %v1381, %v585
        %1383 = vadd.xlane.f32.xlu0 %v1382
        %v1384 = vpop.xlane.xlu0 %1383
        %v1385 = vadd.f32 %v586, %v587
        %v1386 = vadd.f32 %v1385, %v588
        %v1387 = vadd.f32 %v1386, %v589
        %1388 = vadd.xlane.f32.xlu0 %v1387
        %v1389 = vpop.xlane.xlu0 %1388
        %v1390 = vadd.f32 %v590, %v591
        %v1391 = vadd.f32 %v1390, %v592
        %v1392 = vadd.f32 %v1391, %v593
        %1393 = vadd.xlane.f32.xlu0 %v1392
        %v1394 = vpop.xlane.xlu0 %1393
        %v1395 = vadd.f32 %v594, %v595
        %v1396 = vadd.f32 %v1395, %v596
        %v1397 = vadd.f32 %v1396, %v597
        %1398 = vadd.xlane.f32.xlu0 %v1397
        %v1399 = vpop.xlane.xlu0 %1398
        %v1400 = vadd.f32 %v598, %v599
        %v1401 = vadd.f32 %v1400, %v600
        %v1402 = vadd.f32 %v1401, %v601
        %1403 = vadd.xlane.f32.xlu0 %v1402
        %v1404 = vpop.xlane.xlu0 %1403
        %v1405 = vadd.f32 %v602, %v603
        %v1406 = vadd.f32 %v1405, %v604
        %v1407 = vadd.f32 %v1406, %v605
        %1408 = vadd.xlane.f32.xlu0 %v1407
        %v1409 = vpop.xlane.xlu0 %1408
        %v1410 = vadd.f32 %v1218, %v1254
        %v1411 = vadd.f32 %v1219, %v1259
        %v1412 = vadd.f32 %v1220, %v1264
        %v1413 = vadd.f32 %v1221, %v1269
        %v1414 = vadd.f32 %v1222, %v1274
        %v1415 = vadd.f32 %v1223, %v1279
        %v1416 = vadd.f32 %v1224, %v1284
        %v1417 = vadd.f32 %v1225, %v1289
        %v1418 = vadd.f32 %v1226, %v1294
        %v1419 = vadd.f32 %v1227, %v1299
        %v1420 = vadd.f32 %v1228, %v1304
        %v1421 = vadd.f32 %v1229, %v1309
        %v1422 = vadd.f32 %v1230, %v1314
        %v1423 = vadd.f32 %v1231, %v1319
        %v1424 = vadd.f32 %v1232, %v1324
        %v1425 = vadd.f32 %v1233, %v1329
        %v1426 = vadd.f32 %v1234, %v1334
        %v1427 = vadd.f32 %v1235, %v1339
        %v1428 = vadd.f32 %v1236, %v1344
        %v1429 = vadd.f32 %v1237, %v1349
        %v1430 = vadd.f32 %v1238, %v1354
        %v1431 = vadd.f32 %v1239, %v1359
        %v1432 = vadd.f32 %v1240, %v1364
        %v1433 = vadd.f32 %v1241, %v1369
        %v1434 = vadd.f32 %v1242, %v1374
        %v1435 = vadd.f32 %v1243, %v1379
        %v1436 = vadd.f32 %v1244, %v1384
        %v1437 = vadd.f32 %v1245, %v1389
        %v1438 = vadd.f32 %v1246, %v1394
        %v1439 = vadd.f32 %v1247, %v1399
        %v1440 = vadd.f32 %v1248, %v1404
        %v1441 = vadd.f32 %v1249, %v1409
        %vm1442 = vcmask 7168
        %1443 = vst.msk [vmem:[#allocation3] sm:$0xff] %vm1442, %v1410
        %1444 = vst.msk [vmem:[#allocation3 + $0x8] sm:$0xff] %vm1442, %v1411
        %1445 = vst.msk [vmem:[#allocation3 + $0x10] sm:$0xff] %vm1442, %v1412
        %1446 = vst.msk [vmem:[#allocation3 + $0x18] sm:$0xff] %vm1442, %v1413
        %1447 = vst.msk [vmem:[#allocation3 + $0x20] sm:$0xff] %vm1442, %v1414
        %1448 = vst.msk [vmem:[#allocation3 + $0x28] sm:$0xff] %vm1442, %v1415
        %1449 = vst.msk [vmem:[#allocation3 + $0x30] sm:$0xff] %vm1442, %v1416
        %1450 = vst.msk [vmem:[#allocation3 + $0x38] sm:$0xff] %vm1442, %v1417
        %1451 = vst.msk [vmem:[#allocation3 + $0x40] sm:$0xff] %vm1442, %v1418
        %1452 = vst.msk [vmem:[#allocation3 + $0x48] sm:$0xff] %vm1442, %v1419
        %1453 = vst.msk [vmem:[#allocation3 + $0x50] sm:$0xff] %vm1442, %v1420
        %1454 = vst.msk [vmem:[#allocation3 + $0x58] sm:$0xff] %vm1442, %v1421
        %1455 = vst.msk [vmem:[#allocation3 + $0x60] sm:$0xff] %vm1442, %v1422
        %1456 = vst.msk [vmem:[#allocation3 + $0x68] sm:$0xff] %vm1442, %v1423
        %1457 = vst.msk [vmem:[#allocation3 + $0x70] sm:$0xff] %vm1442, %v1424
        %1458 = vst.msk [vmem:[#allocation3 + $0x78] sm:$0xff] %vm1442, %v1425
        %1459 = vst.msk [vmem:[#allocation3 + $0x80] sm:$0xff] %vm1442, %v1426
        %1460 = vst.msk [vmem:[#allocation3 + $0x88] sm:$0xff] %vm1442, %v1427
        %1461 = vst.msk [vmem:[#allocation3 + $0x90] sm:$0xff] %vm1442, %v1428
        %1462 = vst.msk [vmem:[#allocation3 + $0x98] sm:$0xff] %vm1442, %v1429
        %1463 = vst.msk [vmem:[#allocation3 + $0xa0] sm:$0xff] %vm1442, %v1430
        %1464 = vst.msk [vmem:[#allocation3 + $0xa8] sm:$0xff] %vm1442, %v1431
        %1465 = vst.msk [vmem:[#allocation3 + $0xb0] sm:$0xff] %vm1442, %v1432
        %1466 = vst.msk [vmem:[#allocation3 + $0xb8] sm:$0xff] %vm1442, %v1433
        %1467 = vst.msk [vmem:[#allocation3 + $0xc0] sm:$0xff] %vm1442, %v1434
        %1468 = vst.msk [vmem:[#allocation3 + $0xc8] sm:$0xff] %vm1442, %v1435
        %1469 = vst.msk [vmem:[#allocation3 + $0xd0] sm:$0xff] %vm1442, %v1436
        %1470 = vst.msk [vmem:[#allocation3 + $0xd8] sm:$0xff] %vm1442, %v1437
        %1471 = vst.msk [vmem:[#allocation3 + $0xe0] sm:$0xff] %vm1442, %v1438
        %1472 = vst.msk [vmem:[#allocation3 + $0xe8] sm:$0xff] %vm1442, %v1439
        %1473 = vst.msk [vmem:[#allocation3 + $0xf0] sm:$0xff] %vm1442, %v1440
        %1474 = vst.msk [vmem:[#allocation3 + $0xf8] sm:$0xff] %vm1442, %v1441
        // Predicated region
        $region65: #{tpu_custom_call.1} parent=39 // pred_check
          %p1475 = pneg %p345
        $region66: #{tpu_custom_call.1} parent=39 // pred_check_branch
          %1477 = sbr.rel (%p1475) target = $region68
        $region67: #{tpu_custom_call.1} parent=39 // pred_region
          %v1478 = vld [vmem:[%s288] sm:$0xff]
          %v1479 = vld [vmem:[%s288 + $0x8] sm:$0xff]
          %v1480 = vld [vmem:[%s288 + $0x10] sm:$0xff]
          %v1481 = vld [vmem:[%s288 + $0x18] sm:$0xff]
          %v1482 = vld [vmem:[%s288 + $0x20] sm:$0xff]
          %v1483 = vld [vmem:[%s288 + $0x28] sm:$0xff]
          %v1484 = vld [vmem:[%s288 + $0x30] sm:$0xff]
          %v1485 = vld [vmem:[%s288 + $0x38] sm:$0xff]
          %v1486 = vld [vmem:[%s288 + $0x40] sm:$0xff]
          %v1487 = vld [vmem:[%s288 + $0x48] sm:$0xff]
          %v1488 = vld [vmem:[%s288 + $0x50] sm:$0xff]
          %v1489 = vld [vmem:[%s288 + $0x58] sm:$0xff]
          %v1490 = vld [vmem:[%s288 + $0x60] sm:$0xff]
          %v1491 = vld [vmem:[%s288 + $0x68] sm:$0xff]
          %v1492 = vld [vmem:[%s288 + $0x70] sm:$0xff]
          %v1493 = vld [vmem:[%s288 + $0x78] sm:$0xff]
          %v1494 = vld [vmem:[%s288 + $0x80] sm:$0xff]
          %v1495 = vld [vmem:[%s288 + $0x88] sm:$0xff]
          %v1496 = vld [vmem:[%s288 + $0x90] sm:$0xff]
          %v1497 = vld [vmem:[%s288 + $0x98] sm:$0xff]
          %v1498 = vld [vmem:[%s288 + $0xa0] sm:$0xff]
          %v1499 = vld [vmem:[%s288 + $0xa8] sm:$0xff]
          %v1500 = vld [vmem:[%s288 + $0xb0] sm:$0xff]
          %v1501 = vld [vmem:[%s288 + $0xb8] sm:$0xff]
          %v1502 = vld [vmem:[%s288 + $0xc0] sm:$0xff]
          %v1503 = vld [vmem:[%s288 + $0xc8] sm:$0xff]
          %v1504 = vld [vmem:[%s288 + $0xd0] sm:$0xff]
          %v1505 = vld [vmem:[%s288 + $0xd8] sm:$0xff]
          %v1506 = vld [vmem:[%s288 + $0xe0] sm:$0xff]
          %v1507 = vld [vmem:[%s288 + $0xe8] sm:$0xff]
          %v1508 = vld [vmem:[%s288 + $0xf0] sm:$0xff]
          %v1509 = vld [vmem:[%s288 + $0xf8] sm:$0xff]
          %v1510 = vld [vmem:[#allocation2] sm:$0xff]
          %v1511 = vld [vmem:[#allocation2 + $0x8] sm:$0xff]
          %v1512 = vld [vmem:[#allocation2 + $0x10] sm:$0xff]
          %v1513 = vld [vmem:[#allocation2 + $0x18] sm:$0xff]
          %v1514 = vld [vmem:[#allocation2 + $0x20] sm:$0xff]
          %v1515 = vld [vmem:[#allocation2 + $0x28] sm:$0xff]
          %v1516 = vld [vmem:[#allocation2 + $0x30] sm:$0xff]
          %v1517 = vld [vmem:[#allocation2 + $0x38] sm:$0xff]
          %v1518 = vld [vmem:[#allocation2 + $0x40] sm:$0xff]
          %v1519 = vld [vmem:[#allocation2 + $0x48] sm:$0xff]
          %v1520 = vld [vmem:[#allocation2 + $0x50] sm:$0xff]
          %v1521 = vld [vmem:[#allocation2 + $0x58] sm:$0xff]
          %v1522 = vld [vmem:[#allocation2 + $0x60] sm:$0xff]
          %v1523 = vld [vmem:[#allocation2 + $0x68] sm:$0xff]
          %v1524 = vld [vmem:[#allocation2 + $0x70] sm:$0xff]
          %v1525 = vld [vmem:[#allocation2 + $0x78] sm:$0xff]
          %v1526 = vld [vmem:[#allocation2 + $0x80] sm:$0xff]
          %v1527 = vld [vmem:[#allocation2 + $0x88] sm:$0xff]
          %v1528 = vld [vmem:[#allocation2 + $0x90] sm:$0xff]
          %v1529 = vld [vmem:[#allocation2 + $0x98] sm:$0xff]
          %v1530 = vld [vmem:[#allocation2 + $0xa0] sm:$0xff]
          %v1531 = vld [vmem:[#allocation2 + $0xa8] sm:$0xff]
          %v1532 = vld [vmem:[#allocation2 + $0xb0] sm:$0xff]
          %v1533 = vld [vmem:[#allocation2 + $0xb8] sm:$0xff]
          %v1534 = vld [vmem:[#allocation2 + $0xc0] sm:$0xff]
          %v1535 = vld [vmem:[#allocation2 + $0xc8] sm:$0xff]
          %v1536 = vld [vmem:[#allocation2 + $0xd0] sm:$0xff]
          %v1537 = vld [vmem:[#allocation2 + $0xd8] sm:$0xff]
          %v1538 = vld [vmem:[#allocation2 + $0xe0] sm:$0xff]
          %v1539 = vld [vmem:[#allocation2 + $0xe8] sm:$0xff]
          %v1540 = vld [vmem:[#allocation2 + $0xf0] sm:$0xff]
          %v1541 = vld [vmem:[#allocation2 + $0xf8] sm:$0xff]
          %v1542 = vld [vmem:[#allocation3] sm:$0xff]
          %v1543 = vld [vmem:[#allocation3 + $0x8] sm:$0xff]
          %v1544 = vld [vmem:[#allocation3 + $0x10] sm:$0xff]
          %v1545 = vld [vmem:[#allocation3 + $0x18] sm:$0xff]
          %v1546 = vld [vmem:[#allocation3 + $0x20] sm:$0xff]
          %v1547 = vld [vmem:[#allocation3 + $0x28] sm:$0xff]
          %v1548 = vld [vmem:[#allocation3 + $0x30] sm:$0xff]
          %v1549 = vld [vmem:[#allocation3 + $0x38] sm:$0xff]
          %v1550 = vld [vmem:[#allocation3 + $0x40] sm:$0xff]
          %v1551 = vld [vmem:[#allocation3 + $0x48] sm:$0xff]
          %v1552 = vld [vmem:[#allocation3 + $0x50] sm:$0xff]
          %v1553 = vld [vmem:[#allocation3 + $0x58] sm:$0xff]
          %v1554 = vld [vmem:[#allocation3 + $0x60] sm:$0xff]
          %v1555 = vld [vmem:[#allocation3 + $0x68] sm:$0xff]
          %v1556 = vld [vmem:[#allocation3 + $0x70] sm:$0xff]
          %v1557 = vld [vmem:[#allocation3 + $0x78] sm:$0xff]
          %v1558 = vld [vmem:[#allocation3 + $0x80] sm:$0xff]
          %v1559 = vld [vmem:[#allocation3 + $0x88] sm:$0xff]
          %v1560 = vld [vmem:[#allocation3 + $0x90] sm:$0xff]
          %v1561 = vld [vmem:[#allocation3 + $0x98] sm:$0xff]
          %v1562 = vld [vmem:[#allocation3 + $0xa0] sm:$0xff]
          %v1563 = vld [vmem:[#allocation3 + $0xa8] sm:$0xff]
          %v1564 = vld [vmem:[#allocation3 + $0xb0] sm:$0xff]
          %v1565 = vld [vmem:[#allocation3 + $0xb8] sm:$0xff]
          %v1566 = vld [vmem:[#allocation3 + $0xc0] sm:$0xff]
          %v1567 = vld [vmem:[#allocation3 + $0xc8] sm:$0xff]
          %v1568 = vld [vmem:[#allocation3 + $0xd0] sm:$0xff]
          %v1569 = vld [vmem:[#allocation3 + $0xd8] sm:$0xff]
          %v1570 = vld [vmem:[#allocation3 + $0xe0] sm:$0xff]
          %v1571 = vld [vmem:[#allocation3 + $0xe8] sm:$0xff]
          %v1572 = vld [vmem:[#allocation3 + $0xf0] sm:$0xff]
          %v1573 = vld [vmem:[#allocation3 + $0xf8] sm:$0xff]
          %v1574 = vsub.f32 %v1542, 1.0
          %v1575 = vsub.f32 %v1543, 1.0
          %v1576 = vsub.f32 %v1544, 1.0
          %v1577 = vsub.f32 %v1545, 1.0
          %v1578 = vsub.f32 %v1546, 1.0
          %v1579 = vsub.f32 %v1547, 1.0
          %v1580 = vsub.f32 %v1548, 1.0
          %v1581 = vsub.f32 %v1549, 1.0
          %v1582 = vsub.f32 %v1550, 1.0
          %v1583 = vsub.f32 %v1551, 1.0
          %v1584 = vsub.f32 %v1552, 1.0
          %v1585 = vsub.f32 %v1553, 1.0
          %v1586 = vsub.f32 %v1554, 1.0
          %v1587 = vsub.f32 %v1555, 1.0
          %v1588 = vsub.f32 %v1556, 1.0
          %v1589 = vsub.f32 %v1557, 1.0
          %v1590 = vsub.f32 %v1558, 1.0
          %v1591 = vsub.f32 %v1559, 1.0
          %v1592 = vsub.f32 %v1560, 1.0
          %v1593 = vsub.f32 %v1561, 1.0
          %v1594 = vsub.f32 %v1562, 1.0
          %v1595 = vsub.f32 %v1563, 1.0
          %v1596 = vsub.f32 %v1564, 1.0
          %v1597 = vsub.f32 %v1565, 1.0
          %v1598 = vsub.f32 %v1566, 1.0
          %v1599 = vsub.f32 %v1567, 1.0
          %v1600 = vsub.f32 %v1568, 1.0
          %v1601 = vsub.f32 %v1569, 1.0
          %v1602 = vsub.f32 %v1570, 1.0
          %v1603 = vsub.f32 %v1571, 1.0
          %v1604 = vsub.f32 %v1572, 1.0
          %v1605 = vsub.f32 %v1573, 1.0
          %v1606 = vadd.f32 %v1574, 1e-12
          %v1607 = vadd.f32 %v1575, 1e-12
          %v1608 = vadd.f32 %v1576, 1e-12
          %v1609 = vadd.f32 %v1577, 1e-12
          %v1610 = vadd.f32 %v1578, 1e-12
          %v1611 = vadd.f32 %v1579, 1e-12
          %v1612 = vadd.f32 %v1580, 1e-12
          %v1613 = vadd.f32 %v1581, 1e-12
          %v1614 = vadd.f32 %v1582, 1e-12
          %v1615 = vadd.f32 %v1583, 1e-12
          %v1616 = vadd.f32 %v1584, 1e-12
          %v1617 = vadd.f32 %v1585, 1e-12
          %v1618 = vadd.f32 %v1586, 1e-12
          %v1619 = vadd.f32 %v1587, 1e-12
          %v1620 = vadd.f32 %v1588, 1e-12
          %v1621 = vadd.f32 %v1589, 1e-12
          %v1622 = vadd.f32 %v1590, 1e-12
          %v1623 = vadd.f32 %v1591, 1e-12
          %v1624 = vadd.f32 %v1592, 1e-12
          %v1625 = vadd.f32 %v1593, 1e-12
          %v1626 = vadd.f32 %v1594, 1e-12
          %v1627 = vadd.f32 %v1595, 1e-12
          %v1628 = vadd.f32 %v1596, 1e-12
          %v1629 = vadd.f32 %v1597, 1e-12
          %v1630 = vadd.f32 %v1598, 1e-12
          %v1631 = vadd.f32 %v1599, 1e-12
          %v1632 = vadd.f32 %v1600, 1e-12
          %v1633 = vadd.f32 %v1601, 1e-12
          %v1634 = vadd.f32 %v1602, 1e-12
          %v1635 = vadd.f32 %v1603, 1e-12
          %v1636 = vadd.f32 %v1604, 1e-12
          %v1637 = vadd.f32 %v1605, 1e-12
          %v1638 = vrcp.pop %v1606
          %v1639 = vrcp.pop %v1607
          %v1640 = vrcp.pop %v1608
          %v1641 = vrcp.pop %v1609
          %v1642 = vrcp.pop %v1610
          %v1643 = vrcp.pop %v1611
          %v1644 = vrcp.pop %v1612
          %v1645 = vrcp.pop %v1613
          %v1646 = vrcp.pop %v1614
          %v1647 = vrcp.pop %v1615
          %v1648 = vrcp.pop %v1616
          %v1649 = vrcp.pop %v1617
          %v1650 = vrcp.pop %v1618
          %v1651 = vrcp.pop %v1619
          %v1652 = vrcp.pop %v1620
          %v1653 = vrcp.pop %v1621
          %v1654 = vrcp.pop %v1622
          %v1655 = vrcp.pop %v1623
          %v1656 = vrcp.pop %v1624
          %v1657 = vrcp.pop %v1625
          %v1658 = vrcp.pop %v1626
          %v1659 = vrcp.pop %v1627
          %v1660 = vrcp.pop %v1628
          %v1661 = vrcp.pop %v1629
          %v1662 = vrcp.pop %v1630
          %v1663 = vrcp.pop %v1631
          %v1664 = vrcp.pop %v1632
          %v1665 = vrcp.pop %v1633
          %v1666 = vrcp.pop %v1634
          %v1667 = vrcp.pop %v1635
          %v1668 = vrcp.pop %v1636
          %v1669 = vrcp.pop %v1637
          %v1670 = vsub.f32 %v1510, %v1478
          %v1671 = vsub.f32 %v1511, %v1479
          %v1672 = vsub.f32 %v1512, %v1480
          %v1673 = vsub.f32 %v1513, %v1481
          %v1674 = vsub.f32 %v1514, %v1482
          %v1675 = vsub.f32 %v1515, %v1483
          %v1676 = vsub.f32 %v1516, %v1484
          %v1677 = vsub.f32 %v1517, %v1485
          %v1678 = vsub.f32 %v1518, %v1486
          %v1679 = vsub.f32 %v1519, %v1487
          %v1680 = vsub.f32 %v1520, %v1488
          %v1681 = vsub.f32 %v1521, %v1489
          %v1682 = vsub.f32 %v1522, %v1490
          %v1683 = vsub.f32 %v1523, %v1491
          %v1684 = vsub.f32 %v1524, %v1492
          %v1685 = vsub.f32 %v1525, %v1493
          %v1686 = vsub.f32 %v1526, %v1494
          %v1687 = vsub.f32 %v1527, %v1495
          %v1688 = vsub.f32 %v1528, %v1496
          %v1689 = vsub.f32 %v1529, %v1497
          %v1690 = vsub.f32 %v1530, %v1498
          %v1691 = vsub.f32 %v1531, %v1499
          %v1692 = vsub.f32 %v1532, %v1500
          %v1693 = vsub.f32 %v1533, %v1501
          %v1694 = vsub.f32 %v1534, %v1502
          %v1695 = vsub.f32 %v1535, %v1503
          %v1696 = vsub.f32 %v1536, %v1504
          %v1697 = vsub.f32 %v1537, %v1505
          %v1698 = vsub.f32 %v1538, %v1506
          %v1699 = vsub.f32 %v1539, %v1507
          %v1700 = vsub.f32 %v1540, %v1508
          %v1701 = vsub.f32 %v1541, %v1509
          %1703 = vset.pattern.permute.xlu0 0
          %1704 = vperm.xlu0 %1703, %v1638
          %v1705 = vpop.permute.xlu0 %1704
          %1708 = vset.pattern.permute.xlu0 0
          %1709 = vperm.xlu0 %1708, %v1639
          %v1710 = vpop.permute.xlu0 %1709
          %1713 = vset.pattern.permute.xlu0 0
          %1714 = vperm.xlu0 %1713, %v1640
          %v1715 = vpop.permute.xlu0 %1714
          %1718 = vset.pattern.permute.xlu0 0
          %1719 = vperm.xlu0 %1718, %v1641
          %v1720 = vpop.permute.xlu0 %1719
          %1723 = vset.pattern.permute.xlu0 0
          %1724 = vperm.xlu0 %1723, %v1642
          %v1725 = vpop.permute.xlu0 %1724
          %1728 = vset.pattern.permute.xlu0 0
          %1729 = vperm.xlu0 %1728, %v1643
          %v1730 = vpop.permute.xlu0 %1729
          %1733 = vset.pattern.permute.xlu0 0
          %1734 = vperm.xlu0 %1733, %v1644
          %v1735 = vpop.permute.xlu0 %1734
          %1738 = vset.pattern.permute.xlu0 0
          %1739 = vperm.xlu0 %1738, %v1645
          %v1740 = vpop.permute.xlu0 %1739
          %1743 = vset.pattern.permute.xlu0 0
          %1744 = vperm.xlu0 %1743, %v1646
          %v1745 = vpop.permute.xlu0 %1744
          %1748 = vset.pattern.permute.xlu0 0
          %1749 = vperm.xlu0 %1748, %v1647
          %v1750 = vpop.permute.xlu0 %1749
          %1753 = vset.pattern.permute.xlu0 0
          %1754 = vperm.xlu0 %1753, %v1648
          %v1755 = vpop.permute.xlu0 %1754
          %1758 = vset.pattern.permute.xlu0 0
          %1759 = vperm.xlu0 %1758, %v1649
          %v1760 = vpop.permute.xlu0 %1759
          %1763 = vset.pattern.permute.xlu0 0
          %1764 = vperm.xlu0 %1763, %v1650
          %v1765 = vpop.permute.xlu0 %1764
          %1768 = vset.pattern.permute.xlu0 0
          %1769 = vperm.xlu0 %1768, %v1651
          %v1770 = vpop.permute.xlu0 %1769
          %1773 = vset.pattern.permute.xlu0 0
          %1774 = vperm.xlu0 %1773, %v1652
          %v1775 = vpop.permute.xlu0 %1774
          %1778 = vset.pattern.permute.xlu0 0
          %1779 = vperm.xlu0 %1778, %v1653
          %v1780 = vpop.permute.xlu0 %1779
          %1783 = vset.pattern.permute.xlu0 0
          %1784 = vperm.xlu0 %1783, %v1654
          %v1785 = vpop.permute.xlu0 %1784
          %1788 = vset.pattern.permute.xlu0 0
          %1789 = vperm.xlu0 %1788, %v1655
          %v1790 = vpop.permute.xlu0 %1789
          %1793 = vset.pattern.permute.xlu0 0
          %1794 = vperm.xlu0 %1793, %v1656
          %v1795 = vpop.permute.xlu0 %1794
          %1798 = vset.pattern.permute.xlu0 0
          %1799 = vperm.xlu0 %1798, %v1657
          %v1800 = vpop.permute.xlu0 %1799
          %1803 = vset.pattern.permute.xlu0 0
          %1804 = vperm.xlu0 %1803, %v1658
          %v1805 = vpop.permute.xlu0 %1804
          %1808 = vset.pattern.permute.xlu0 0
          %1809 = vperm.xlu0 %1808, %v1659
          %v1810 = vpop.permute.xlu0 %1809
          %1813 = vset.pattern.permute.xlu0 0
          %1814 = vperm.xlu0 %1813, %v1660
          %v1815 = vpop.permute.xlu0 %1814
          %1818 = vset.pattern.permute.xlu0 0
          %1819 = vperm.xlu0 %1818, %v1661
          %v1820 = vpop.permute.xlu0 %1819
          %1823 = vset.pattern.permute.xlu0 0
          %1824 = vperm.xlu0 %1823, %v1662
          %v1825 = vpop.permute.xlu0 %1824
          %1828 = vset.pattern.permute.xlu0 0
          %1829 = vperm.xlu0 %1828, %v1663
          %v1830 = vpop.permute.xlu0 %1829
          %1833 = vset.pattern.permute.xlu0 0
          %1834 = vperm.xlu0 %1833, %v1664
          %v1835 = vpop.permute.xlu0 %1834
          %1838 = vset.pattern.permute.xlu0 0
          %1839 = vperm.xlu0 %1838, %v1665
          %v1840 = vpop.permute.xlu0 %1839
          %1843 = vset.pattern.permute.xlu0 0
          %1844 = vperm.xlu0 %1843, %v1666
          %v1845 = vpop.permute.xlu0 %1844
          %1848 = vset.pattern.permute.xlu0 0
          %1849 = vperm.xlu0 %1848, %v1667
          %v1850 = vpop.permute.xlu0 %1849
          %1853 = vset.pattern.permute.xlu0 0
          %1854 = vperm.xlu0 %1853, %v1668
          %v1855 = vpop.permute.xlu0 %1854
          %1858 = vset.pattern.permute.xlu0 0
          %1859 = vperm.xlu0 %1858, %v1669
          %v1860 = vpop.permute.xlu0 %1859
          %v1862 = vmul.f32 %v1670, %v1705
          %v1863 = vmul.f32 %v1671, %v1710
          %v1864 = vmul.f32 %v1672, %v1715
          %v1865 = vmul.f32 %v1673, %v1720
          %v1866 = vmul.f32 %v1674, %v1725
          %v1867 = vmul.f32 %v1675, %v1730
          %v1868 = vmul.f32 %v1676, %v1735
          %v1869 = vmul.f32 %v1677, %v1740
          %v1870 = vmul.f32 %v1678, %v1745
          %v1871 = vmul.f32 %v1679, %v1750
          %v1872 = vmul.f32 %v1680, %v1755
          %v1873 = vmul.f32 %v1681, %v1760
          %v1874 = vmul.f32 %v1682, %v1765
          %v1875 = vmul.f32 %v1683, %v1770
          %v1876 = vmul.f32 %v1684, %v1775
          %v1877 = vmul.f32 %v1685, %v1780
          %v1878 = vmul.f32 %v1686, %v1785
          %v1879 = vmul.f32 %v1687, %v1790
          %v1880 = vmul.f32 %v1688, %v1795
          %v1881 = vmul.f32 %v1689, %v1800
          %v1882 = vmul.f32 %v1690, %v1805
          %v1883 = vmul.f32 %v1691, %v1810
          %v1884 = vmul.f32 %v1692, %v1815
          %v1885 = vmul.f32 %v1693, %v1820
          %v1886 = vmul.f32 %v1694, %v1825
          %v1887 = vmul.f32 %v1695, %v1830
          %v1888 = vmul.f32 %v1696, %v1835
          %v1889 = vmul.f32 %v1697, %v1840
          %v1890 = vmul.f32 %v1698, %v1845
          %v1891 = vmul.f32 %v1699, %v1850
          %v1892 = vmul.f32 %v1700, %v1855
          %v1893 = vmul.f32 %v1701, %v1860
          %v1894 = vld [vmem:[#allocation10] sm:$0xff]
          %v1895 = vld [vmem:[#allocation10 + $0x8] sm:$0xff]
          %v1896 = vld [vmem:[#allocation10 + $0x10] sm:$0xff]
          %v1897 = vld [vmem:[#allocation10 + $0x18] sm:$0xff]
          %v1898 = vld [vmem:[#allocation10 + $0x20] sm:$0xff]
          %v1899 = vld [vmem:[#allocation10 + $0x28] sm:$0xff]
          %v1900 = vld [vmem:[#allocation10 + $0x30] sm:$0xff]
          %v1901 = vld [vmem:[#allocation10 + $0x38] sm:$0xff]
          %v1902 = vld [vmem:[#allocation10 + $0x40] sm:$0xff]
          %v1903 = vld [vmem:[#allocation10 + $0x48] sm:$0xff]
          %v1904 = vld [vmem:[#allocation10 + $0x50] sm:$0xff]
          %v1905 = vld [vmem:[#allocation10 + $0x58] sm:$0xff]
          %v1906 = vld [vmem:[#allocation10 + $0x60] sm:$0xff]
          %v1907 = vld [vmem:[#allocation10 + $0x68] sm:$0xff]
          %v1908 = vld [vmem:[#allocation10 + $0x70] sm:$0xff]
          %v1909 = vld [vmem:[#allocation10 + $0x78] sm:$0xff]
          %v1910 = vld [vmem:[#allocation11] sm:$0xff]
          %v1911 = vld [vmem:[#allocation11 + $0x8] sm:$0xff]
          %v1912 = vld [vmem:[#allocation11 + $0x10] sm:$0xff]
          %v1913 = vld [vmem:[#allocation11 + $0x18] sm:$0xff]
          %v1914 = vld [vmem:[#allocation11 + $0x20] sm:$0xff]
          %v1915 = vld [vmem:[#allocation11 + $0x28] sm:$0xff]
          %v1916 = vld [vmem:[#allocation11 + $0x30] sm:$0xff]
          %v1917 = vld [vmem:[#allocation11 + $0x38] sm:$0xff]
          %v1918 = vld [vmem:[#allocation11 + $0x40] sm:$0xff]
          %v1919 = vld [vmem:[#allocation11 + $0x48] sm:$0xff]
          %v1920 = vld [vmem:[#allocation11 + $0x50] sm:$0xff]
          %v1921 = vld [vmem:[#allocation11 + $0x58] sm:$0xff]
          %v1922 = vld [vmem:[#allocation11 + $0x60] sm:$0xff]
          %v1923 = vld [vmem:[#allocation11 + $0x68] sm:$0xff]
          %v1924 = vld [vmem:[#allocation11 + $0x70] sm:$0xff]
          %v1925 = vld [vmem:[#allocation11 + $0x78] sm:$0xff]
          %1926 = vmatprep.subr.mxu0 0.0
          %1927 = vmatpush1.msra.mxu0 %v1910
          %1928 = vmatprep.subr.mxu0 0.0
          %1929 = vmatpush1.msra.mxu0 %v1911
          %1930 = vmatprep.subr.mxu0 0.0
          %1931 = vmatpush1.msra.mxu0 %v1912
          %1932 = vmatprep.subr.mxu0 0.0
          %1933 = vmatpush1.msra.mxu0 %v1913
          %1934 = vmatprep.subr.mxu0 0.0
          %1935 = vmatpush1.msra.mxu0 %v1914
          %1936 = vmatprep.subr.mxu0 0.0
          %1937 = vmatpush1.msra.mxu0 %v1915
          %1938 = vmatprep.subr.mxu0 0.0
          %1939 = vmatpush1.msra.mxu0 %v1916
          %1940 = vmatprep.subr.mxu0 0.0
          %1941 = vmatpush1.msra.mxu0 %v1917
          %1942 = vmatprep.subr.mxu0 0.0
          %1943 = vmatpush1.msra.mxu0 %v1918
          %1944 = vmatprep.subr.mxu0 0.0
          %1945 = vmatpush1.msra.mxu0 %v1919
          %1946 = vmatprep.subr.mxu0 0.0
          %1947 = vmatpush1.msra.mxu0 %v1920
          %1948 = vmatprep.subr.mxu0 0.0
          %1949 = vmatpush1.msra.mxu0 %v1921
          %1950 = vmatprep.subr.mxu0 0.0
          %1951 = vmatpush1.msra.mxu0 %v1922
          %1952 = vmatprep.subr.mxu0 0.0
          %1953 = vmatpush1.msra.mxu0 %v1923
          %1954 = vmatprep.subr.mxu0 0.0
          %1955 = vmatpush1.msra.mxu0 %v1924
          %1956 = vmatprep.subr.mxu0 0.0
          %1957 = vmatpush1.msra.mxu0 %v1925
          %1958 = vmatprep.subr.mxu0 0.0
          %1959 = vmatpush1.msra.mxu0 0.0
          %1960 = vmatprep.subr.mxu0 0.0
          %1961 = vmatpush1.msra.mxu0 0.0
          %1962 = vmatprep.subr.mxu0 0.0
          %1963 = vmatpush1.msra.mxu0 0.0
          %1964 = vmatprep.subr.mxu0 0.0
          %1965 = vmatpush1.msra.mxu0 0.0
          %1966 = vmatprep.subr.mxu0 0.0
          %1967 = vmatpush1.msra.mxu0 0.0
          %1968 = vmatprep.subr.mxu0 0.0
          %1969 = vmatpush1.msra.mxu0 0.0
          %1970 = vmatprep.subr.mxu0 0.0
          %1971 = vmatpush1.msra.mxu0 0.0
          %1972 = vmatprep.subr.mxu0 0.0
          %1973 = vmatpush1.msra.mxu0 0.0
          %1974 = vmatprep.subr.mxu0 0.0
          %1975 = vmatpush1.msra.mxu0 0.0
          %1976 = vmatprep.subr.mxu0 0.0
          %1977 = vmatpush1.msra.mxu0 0.0
          %1978 = vmatprep.subr.mxu0 0.0
          %1979 = vmatpush1.msra.mxu0 0.0
          %1980 = vmatprep.subr.mxu0 0.0
          %1981 = vmatpush1.msra.mxu0 0.0
          %1982 = vmatprep.subr.mxu0 0.0
          %1983 = vmatpush1.msra.mxu0 0.0
          %1984 = vmatprep.subr.mxu0 0.0
          %1985 = vmatpush1.msra.mxu0 0.0
          %1986 = vmatprep.subr.mxu0 0.0
          %1987 = vmatpush1.msra.mxu0 0.0
          %1988 = vmatprep.subr.mxu0 0.0
          %1989 = vmatpush1.msra.mxu0 0.0
          %1990 = vmatprep.mubr.f32.mxu0 0.0
          %1991 = vmatmul.mubr.f32.gmra.mrb[0].mxu0 %v1862
          %v1992 = vpop.f32.mrb[0].mxu0
          %v1993 = vadd.f32 0.0, %v1992
          %v1994 = vpop.f32.mrb[0].mxu0
          %1995 = vmatprep.mubr.f32.mxu0 0.0
          %1996 = vmatmul.mubr.f32.gmra.mrb[0].mxu0 %v1863
          %v1997 = vpop.f32.mrb[0].mxu0
          %v1998 = vadd.f32 0.0, %v1997
          %v1999 = vpop.f32.mrb[0].mxu0
          %2000 = vmatprep.mubr.f32.mxu0 0.0
          %2001 = vmatmul.mubr.f32.gmra.mrb[0].mxu0 %v1864
          %v2002 = vpop.f32.mrb[0].mxu0
          %v2003 = vadd.f32 0.0, %v2002
          %v2004 = vpop.f32.mrb[0].mxu0
          %2005 = vmatprep.mubr.f32.mxu0 0.0
          %2006 = vmatmul.mubr.f32.gmra.mrb[0].mxu0 %v1865
          %v2007 = vpop.f32.mrb[0].mxu0
          %v2008 = vadd.f32 0.0, %v2007
          %v2009 = vpop.f32.mrb[0].mxu0
          %2010 = vmatprep.mubr.f32.mxu0 0.0
          %2011 = vmatmul.mubr.f32.gmra.mrb[0].mxu0 %v1866
          %v2012 = vpop.f32.mrb[0].mxu0
          %v2013 = vadd.f32 0.0, %v2012
          %v2014 = vpop.f32.mrb[0].mxu0
          %2015 = vmatprep.mubr.f32.mxu0 0.0
          %2016 = vmatmul.mubr.f32.gmra.mrb[0].mxu0 %v1867
          %v2017 = vpop.f32.mrb[0].mxu0
          %v2018 = vadd.f32 0.0, %v2017
          %v2019 = vpop.f32.mrb[0].mxu0
          %2020 = vmatprep.mubr.f32.mxu0 0.0
          %2021 = vmatmul.mubr.f32.gmra.mrb[0].mxu0 %v1868
          %v2022 = vpop.f32.mrb[0].mxu0
          %v2023 = vadd.f32 0.0, %v2022
          %v2024 = vpop.f32.mrb[0].mxu0
          %2025 = vmatprep.mubr.f32.mxu0 0.0
          %2026 = vmatmul.mubr.f32.gmra.mrb[0].mxu0 %v1869
          %v2027 = vpop.f32.mrb[0].mxu0
          %v2028 = vadd.f32 0.0, %v2027
          %v2029 = vpop.f32.mrb[0].mxu0
          %2030 = vmatprep.mubr.f32.mxu0 0.0
          %2031 = vmatmul.mubr.f32.gmra.mrb[0].mxu0 %v1870
          %v2032 = vpop.f32.mrb[0].mxu0
          %v2033 = vadd.f32 0.0, %v2032
          %v2034 = vpop.f32.mrb[0].mxu0
          %2035 = vmatprep.mubr.f32.mxu0 0.0
          %2036 = vmatmul.mubr.f32.gmra.mrb[0].mxu0 %v1871
          %v2037 = vpop.f32.mrb[0].mxu0
          %v2038 = vadd.f32 0.0, %v2037
          %v2039 = vpop.f32.mrb[0].mxu0
          %2040 = vmatprep.mubr.f32.mxu0 0.0
          %2041 = vmatmul.mubr.f32.gmra.mrb[0].mxu0 %v1872
          %v2042 = vpop.f32.mrb[0].mxu0
          %v2043 = vadd.f32 0.0, %v2042
          %v2044 = vpop.f32.mrb[0].mxu0
          %2045 = vmatprep.mubr.f32.mxu0 0.0
          %2046 = vmatmul.mubr.f32.gmra.mrb[0].mxu0 %v1873
          %v2047 = vpop.f32.mrb[0].mxu0
          %v2048 = vadd.f32 0.0, %v2047
          %v2049 = vpop.f32.mrb[0].mxu0
          %2050 = vmatprep.mubr.f32.mxu0 0.0
          %2051 = vmatmul.mubr.f32.gmra.mrb[0].mxu0 %v1874
          %v2052 = vpop.f32.mrb[0].mxu0
          %v2053 = vadd.f32 0.0, %v2052
          %v2054 = vpop.f32.mrb[0].mxu0
          %2055 = vmatprep.mubr.f32.mxu0 0.0
          %2056 = vmatmul.mubr.f32.gmra.mrb[0].mxu0 %v1875
          %v2057 = vpop.f32.mrb[0].mxu0
          %v2058 = vadd.f32 0.0, %v2057
          %v2059 = vpop.f32.mrb[0].mxu0
          %2060 = vmatprep.mubr.f32.mxu0 0.0
          %2061 = vmatmul.mubr.f32.gmra.mrb[0].mxu0 %v1876
          %v2062 = vpop.f32.mrb[0].mxu0
          %v2063 = vadd.f32 0.0, %v2062
          %v2064 = vpop.f32.mrb[0].mxu0
          %2065 = vmatprep.mubr.f32.mxu0 0.0
          %2066 = vmatmul.mubr.f32.gmra.mrb[0].mxu0 %v1877
          %v2067 = vpop.f32.mrb[0].mxu0
          %v2068 = vadd.f32 0.0, %v2067
          %v2069 = vpop.f32.mrb[0].mxu0
          %2070 = vmatprep.mubr.f32.mxu0 0.0
          %2071 = vmatmul.mubr.f32.gmra.mrb[0].mxu0 %v1878
          %v2072 = vpop.f32.mrb[0].mxu0
          %v2073 = vadd.f32 0.0, %v2072
          %v2074 = vpop.f32.mrb[0].mxu0
          %2075 = vmatprep.mubr.f32.mxu0 0.0
          %2076 = vmatmul.mubr.f32.gmra.mrb[0].mxu0 %v1879
          %v2077 = vpop.f32.mrb[0].mxu0
          %v2078 = vadd.f32 0.0, %v2077
          %v2079 = vpop.f32.mrb[0].mxu0
          %2080 = vmatprep.mubr.f32.mxu0 0.0
          %2081 = vmatmul.mubr.f32.gmra.mrb[0].mxu0 %v1880
          %v2082 = vpop.f32.mrb[0].mxu0
          %v2083 = vadd.f32 0.0, %v2082
          %v2084 = vpop.f32.mrb[0].mxu0
          %2085 = vmatprep.mubr.f32.mxu0 0.0
          %2086 = vmatmul.mubr.f32.gmra.mrb[0].mxu0 %v1881
          %v2087 = vpop.f32.mrb[0].mxu0
          %v2088 = vadd.f32 0.0, %v2087
          %v2089 = vpop.f32.mrb[0].mxu0
          %2090 = vmatprep.mubr.f32.mxu0 0.0
          %2091 = vmatmul.mubr.f32.gmra.mrb[0].mxu0 %v1882
          %v2092 = vpop.f32.mrb[0].mxu0
          %v2093 = vadd.f32 0.0, %v2092
          %v2094 = vpop.f32.mrb[0].mxu0
          %2095 = vmatprep.mubr.f32.mxu0 0.0
          %2096 = vmatmul.mubr.f32.gmra.mrb[0].mxu0 %v1883
          %v2097 = vpop.f32.mrb[0].mxu0
          %v2098 = vadd.f32 0.0, %v2097
          %v2099 = vpop.f32.mrb[0].mxu0
          %2100 = vmatprep.mubr.f32.mxu0 0.0
          %2101 = vmatmul.mubr.f32.gmra.mrb[0].mxu0 %v1884
          %v2102 = vpop.f32.mrb[0].mxu0
          %v2103 = vadd.f32 0.0, %v2102
          %v2104 = vpop.f32.mrb[0].mxu0
          %2105 = vmatprep.mubr.f32.mxu0 0.0
          %2106 = vmatmul.mubr.f32.gmra.mrb[0].mxu0 %v1885
          %v2107 = vpop.f32.mrb[0].mxu0
          %v2108 = vadd.f32 0.0, %v2107
          %v2109 = vpop.f32.mrb[0].mxu0
          %2110 = vmatprep.mubr.f32.mxu0 0.0
          %2111 = vmatmul.mubr.f32.gmra.mrb[0].mxu0 %v1886
          %v2112 = vpop.f32.mrb[0].mxu0
          %v2113 = vadd.f32 0.0, %v2112
          %v2114 = vpop.f32.mrb[0].mxu0
          %2115 = vmatprep.mubr.f32.mxu0 0.0
          %2116 = vmatmul.mubr.f32.gmra.mrb[0].mxu0 %v1887
          %v2117 = vpop.f32.mrb[0].mxu0
          %v2118 = vadd.f32 0.0, %v2117
          %v2119 = vpop.f32.mrb[0].mxu0
          %2120 = vmatprep.mubr.f32.mxu0 0.0
          %2121 = vmatmul.mubr.f32.gmra.mrb[0].mxu0 %v1888
          %v2122 = vpop.f32.mrb[0].mxu0
          %v2123 = vadd.f32 0.0, %v2122
          %v2124 = vpop.f32.mrb[0].mxu0
          %2125 = vmatprep.mubr.f32.mxu0 0.0
          %2126 = vmatmul.mubr.f32.gmra.mrb[0].mxu0 %v1889
          %v2127 = vpop.f32.mrb[0].mxu0
          %v2128 = vadd.f32 0.0, %v2127
          %v2129 = vpop.f32.mrb[0].mxu0
          %2130 = vmatprep.mubr.f32.mxu0 0.0
          %2131 = vmatmul.mubr.f32.gmra.mrb[0].mxu0 %v1890
          %v2132 = vpop.f32.mrb[0].mxu0
          %v2133 = vadd.f32 0.0, %v2132
          %v2134 = vpop.f32.mrb[0].mxu0
          %2135 = vmatprep.mubr.f32.mxu0 0.0
          %2136 = vmatmul.mubr.f32.gmra.mrb[0].mxu0 %v1891
          %v2137 = vpop.f32.mrb[0].mxu0
          %v2138 = vadd.f32 0.0, %v2137
          %v2139 = vpop.f32.mrb[0].mxu0
          %2140 = vmatprep.mubr.f32.mxu0 0.0
          %2141 = vmatmul.mubr.f32.gmra.mrb[0].mxu0 %v1892
          %v2142 = vpop.f32.mrb[0].mxu0
          %v2143 = vadd.f32 0.0, %v2142
          %v2144 = vpop.f32.mrb[0].mxu0
          %2145 = vmatprep.mubr.f32.mxu0 0.0
          %2146 = vmatmul.mubr.f32.gmra.mrb[0].mxu0 %v1893
          %v2147 = vpop.f32.mrb[0].mxu0
          %v2148 = vadd.f32 0.0, %v2147
          %v2149 = vpop.f32.mrb[0].mxu0
          %2150 = vdwg.mxu0
          %2151 = vmatprep.subr.mxu0 0.0
          %2152 = vmatpush1.msra.mxu0 %v1894
          %2153 = vmatprep.subr.mxu0 0.0
          %2154 = vmatpush1.msra.mxu0 %v1895
          %2155 = vmatprep.subr.mxu0 0.0
          %2156 = vmatpush1.msra.mxu0 %v1896
          %2157 = vmatprep.subr.mxu0 0.0
          %2158 = vmatpush1.msra.mxu0 %v1897
          %2159 = vmatprep.subr.mxu0 0.0
          %2160 = vmatpush1.msra.mxu0 %v1898
          %2161 = vmatprep.subr.mxu0 0.0
          %2162 = vmatpush1.msra.mxu0 %v1899
          %2163 = vmatprep.subr.mxu0 0.0
          %2164 = vmatpush1.msra.mxu0 %v1900
          %2165 = vmatprep.subr.mxu0 0.0
          %2166 = vmatpush1.msra.mxu0 %v1901
          %2167 = vmatprep.subr.mxu0 0.0
          %2168 = vmatpush1.msra.mxu0 %v1902
          %2169 = vmatprep.subr.mxu0 0.0
          %2170 = vmatpush1.msra.mxu0 %v1903
          %2171 = vmatprep.subr.mxu0 0.0
          %2172 = vmatpush1.msra.mxu0 %v1904
          %2173 = vmatprep.subr.mxu0 0.0
          %2174 = vmatpush1.msra.mxu0 %v1905
          %2175 = vmatprep.subr.mxu0 0.0
          %2176 = vmatpush1.msra.mxu0 %v1906
          %2177 = vmatprep.subr.mxu0 0.0
          %2178 = vmatpush1.msra.mxu0 %v1907
          %2179 = vmatprep.subr.mxu0 0.0
          %2180 = vmatpush1.msra.mxu0 %v1908
          %2181 = vmatprep.subr.mxu0 0.0
          %2182 = vmatpush1.msra.mxu0 %v1909
          %2183 = vmatprep.subr.mxu0 0.0
          %2184 = vmatpush1.msra.mxu0 0.0
          %2185 = vmatprep.subr.mxu0 0.0
          %2186 = vmatpush1.msra.mxu0 0.0
          %2187 = vmatprep.subr.mxu0 0.0
          %2188 = vmatpush1.msra.mxu0 0.0
          %2189 = vmatprep.subr.mxu0 0.0
          %2190 = vmatpush1.msra.mxu0 0.0
          %2191 = vmatprep.subr.mxu0 0.0
          %2192 = vmatpush1.msra.mxu0 0.0
          %2193 = vmatprep.subr.mxu0 0.0
          %2194 = vmatpush1.msra.mxu0 0.0
          %2195 = vmatprep.subr.mxu0 0.0
          %2196 = vmatpush1.msra.mxu0 0.0
          %2197 = vmatprep.subr.mxu0 0.0
          %2198 = vmatpush1.msra.mxu0 0.0
          %2199 = vmatprep.subr.mxu0 0.0
          %2200 = vmatpush1.msra.mxu0 0.0
          %2201 = vmatprep.subr.mxu0 0.0
          %2202 = vmatpush1.msra.mxu0 0.0
          %2203 = vmatprep.subr.mxu0 0.0
          %2204 = vmatpush1.msra.mxu0 0.0
          %2205 = vmatprep.subr.mxu0 0.0
          %2206 = vmatpush1.msra.mxu0 0.0
          %2207 = vmatprep.subr.mxu0 0.0
          %2208 = vmatpush1.msra.mxu0 0.0
          %2209 = vmatprep.subr.mxu0 0.0
          %2210 = vmatpush1.msra.mxu0 0.0
          %2211 = vmatprep.subr.mxu0 0.0
          %2212 = vmatpush1.msra.mxu0 0.0
          %2213 = vmatprep.subr.mxu0 0.0
          %2214 = vmatpush1.msra.mxu0 0.0
          %2215 = vmatprep.mubr.f32.mxu0 0.0
          %2216 = vmatmul.mubr.f32.gmra.mrb[0].mxu0 %v1478
          %v2217 = vpop.f32.mrb[0].mxu0
          %v2218 = vadd.f32 %v1993, %v2217
          %v2219 = vpop.f32.mrb[0].mxu0
          %2220 = vmatprep.mubr.f32.mxu0 0.0
          %2221 = vmatmul.mubr.f32.gmra.mrb[0].mxu0 %v1479
          %v2222 = vpop.f32.mrb[0].mxu0
          %v2223 = vadd.f32 %v1998, %v2222
          %v2224 = vpop.f32.mrb[0].mxu0
          %2225 = vmatprep.mubr.f32.mxu0 0.0
          %2226 = vmatmul.mubr.f32.gmra.mrb[0].mxu0 %v1480
          %v2227 = vpop.f32.mrb[0].mxu0
          %v2228 = vadd.f32 %v2003, %v2227
          %v2229 = vpop.f32.mrb[0].mxu0
          %2230 = vmatprep.mubr.f32.mxu0 0.0
          %2231 = vmatmul.mubr.f32.gmra.mrb[0].mxu0 %v1481
          %v2232 = vpop.f32.mrb[0].mxu0
          %v2233 = vadd.f32 %v2008, %v2232
          %v2234 = vpop.f32.mrb[0].mxu0
          %2235 = vmatprep.mubr.f32.mxu0 0.0
          %2236 = vmatmul.mubr.f32.gmra.mrb[0].mxu0 %v1482
          %v2237 = vpop.f32.mrb[0].mxu0
          %v2238 = vadd.f32 %v2013, %v2237
          %v2239 = vpop.f32.mrb[0].mxu0
          %2240 = vmatprep.mubr.f32.mxu0 0.0
          %2241 = vmatmul.mubr.f32.gmra.mrb[0].mxu0 %v1483
          %v2242 = vpop.f32.mrb[0].mxu0
          %v2243 = vadd.f32 %v2018, %v2242
          %v2244 = vpop.f32.mrb[0].mxu0
          %2245 = vmatprep.mubr.f32.mxu0 0.0
          %2246 = vmatmul.mubr.f32.gmra.mrb[0].mxu0 %v1484
          %v2247 = vpop.f32.mrb[0].mxu0
          %v2248 = vadd.f32 %v2023, %v2247
          %v2249 = vpop.f32.mrb[0].mxu0
          %2250 = vmatprep.mubr.f32.mxu0 0.0
          %2251 = vmatmul.mubr.f32.gmra.mrb[0].mxu0 %v1485
          %v2252 = vpop.f32.mrb[0].mxu0
          %v2253 = vadd.f32 %v2028, %v2252
          %v2254 = vpop.f32.mrb[0].mxu0
          %2255 = vmatprep.mubr.f32.mxu0 0.0
          %2256 = vmatmul.mubr.f32.gmra.mrb[0].mxu0 %v1486
          %v2257 = vpop.f32.mrb[0].mxu0
          %v2258 = vadd.f32 %v2033, %v2257
          %v2259 = vpop.f32.mrb[0].mxu0
          %2260 = vmatprep.mubr.f32.mxu0 0.0
          %2261 = vmatmul.mubr.f32.gmra.mrb[0].mxu0 %v1487
          %v2262 = vpop.f32.mrb[0].mxu0
          %v2263 = vadd.f32 %v2038, %v2262
          %v2264 = vpop.f32.mrb[0].mxu0
          %2265 = vmatprep.mubr.f32.mxu0 0.0
          %2266 = vmatmul.mubr.f32.gmra.mrb[0].mxu0 %v1488
          %v2267 = vpop.f32.mrb[0].mxu0
          %v2268 = vadd.f32 %v2043, %v2267
          %v2269 = vpop.f32.mrb[0].mxu0
          %2270 = vmatprep.mubr.f32.mxu0 0.0
          %2271 = vmatmul.mubr.f32.gmra.mrb[0].mxu0 %v1489
          %v2272 = vpop.f32.mrb[0].mxu0
          %v2273 = vadd.f32 %v2048, %v2272
          %v2274 = vpop.f32.mrb[0].mxu0
          %2275 = vmatprep.mubr.f32.mxu0 0.0
          %2276 = vmatmul.mubr.f32.gmra.mrb[0].mxu0 %v1490
          %v2277 = vpop.f32.mrb[0].mxu0
          %v2278 = vadd.f32 %v2053, %v2277
          %v2279 = vpop.f32.mrb[0].mxu0
          %2280 = vmatprep.mubr.f32.mxu0 0.0
          %2281 = vmatmul.mubr.f32.gmra.mrb[0].mxu0 %v1491
          %v2282 = vpop.f32.mrb[0].mxu0
          %v2283 = vadd.f32 %v2058, %v2282
          %v2284 = vpop.f32.mrb[0].mxu0
          %2285 = vmatprep.mubr.f32.mxu0 0.0
          %2286 = vmatmul.mubr.f32.gmra.mrb[0].mxu0 %v1492
          %v2287 = vpop.f32.mrb[0].mxu0
          %v2288 = vadd.f32 %v2063, %v2287
          %v2289 = vpop.f32.mrb[0].mxu0
          %2290 = vmatprep.mubr.f32.mxu0 0.0
          %2291 = vmatmul.mubr.f32.gmra.mrb[0].mxu0 %v1493
          %v2292 = vpop.f32.mrb[0].mxu0
          %v2293 = vadd.f32 %v2068, %v2292
          %v2294 = vpop.f32.mrb[0].mxu0
          %2295 = vmatprep.mubr.f32.mxu0 0.0
          %2296 = vmatmul.mubr.f32.gmra.mrb[0].mxu0 %v1494
          %v2297 = vpop.f32.mrb[0].mxu0
          %v2298 = vadd.f32 %v2073, %v2297
          %v2299 = vpop.f32.mrb[0].mxu0
          %2300 = vmatprep.mubr.f32.mxu0 0.0
          %2301 = vmatmul.mubr.f32.gmra.mrb[0].mxu0 %v1495
          %v2302 = vpop.f32.mrb[0].mxu0
          %v2303 = vadd.f32 %v2078, %v2302
          %v2304 = vpop.f32.mrb[0].mxu0
          %2305 = vmatprep.mubr.f32.mxu0 0.0
          %2306 = vmatmul.mubr.f32.gmra.mrb[0].mxu0 %v1496
          %v2307 = vpop.f32.mrb[0].mxu0
          %v2308 = vadd.f32 %v2083, %v2307
          %v2309 = vpop.f32.mrb[0].mxu0
          %2310 = vmatprep.mubr.f32.mxu0 0.0
          %2311 = vmatmul.mubr.f32.gmra.mrb[0].mxu0 %v1497
          %v2312 = vpop.f32.mrb[0].mxu0
          %v2313 = vadd.f32 %v2088, %v2312
          %v2314 = vpop.f32.mrb[0].mxu0
          %2315 = vmatprep.mubr.f32.mxu0 0.0
          %2316 = vmatmul.mubr.f32.gmra.mrb[0].mxu0 %v1498
          %v2317 = vpop.f32.mrb[0].mxu0
          %v2318 = vadd.f32 %v2093, %v2317
          %v2319 = vpop.f32.mrb[0].mxu0
          %2320 = vmatprep.mubr.f32.mxu0 0.0
          %2321 = vmatmul.mubr.f32.gmra.mrb[0].mxu0 %v1499
          %v2322 = vpop.f32.mrb[0].mxu0
          %v2323 = vadd.f32 %v2098, %v2322
          %v2324 = vpop.f32.mrb[0].mxu0
          %2325 = vmatprep.mubr.f32.mxu0 0.0
          %2326 = vmatmul.mubr.f32.gmra.mrb[0].mxu0 %v1500
          %v2327 = vpop.f32.mrb[0].mxu0
          %v2328 = vadd.f32 %v2103, %v2327
          %v2329 = vpop.f32.mrb[0].mxu0
          %2330 = vmatprep.mubr.f32.mxu0 0.0
          %2331 = vmatmul.mubr.f32.gmra.mrb[0].mxu0 %v1501
          %v2332 = vpop.f32.mrb[0].mxu0
          %v2333 = vadd.f32 %v2108, %v2332
          %v2334 = vpop.f32.mrb[0].mxu0
          %2335 = vmatprep.mubr.f32.mxu0 0.0
          %2336 = vmatmul.mubr.f32.gmra.mrb[0].mxu0 %v1502
          %v2337 = vpop.f32.mrb[0].mxu0
          %v2338 = vadd.f32 %v2113, %v2337
          %v2339 = vpop.f32.mrb[0].mxu0
          %2340 = vmatprep.mubr.f32.mxu0 0.0
          %2341 = vmatmul.mubr.f32.gmra.mrb[0].mxu0 %v1503
          %v2342 = vpop.f32.mrb[0].mxu0
          %v2343 = vadd.f32 %v2118, %v2342
          %v2344 = vpop.f32.mrb[0].mxu0
          %2345 = vmatprep.mubr.f32.mxu0 0.0
          %2346 = vmatmul.mubr.f32.gmra.mrb[0].mxu0 %v1504
          %v2347 = vpop.f32.mrb[0].mxu0
          %v2348 = vadd.f32 %v2123, %v2347
          %v2349 = vpop.f32.mrb[0].mxu0
          %2350 = vmatprep.mubr.f32.mxu0 0.0
          %2351 = vmatmul.mubr.f32.gmra.mrb[0].mxu0 %v1505
          %v2352 = vpop.f32.mrb[0].mxu0
          %v2353 = vadd.f32 %v2128, %v2352
          %v2354 = vpop.f32.mrb[0].mxu0
          %2355 = vmatprep.mubr.f32.mxu0 0.0
          %2356 = vmatmul.mubr.f32.gmra.mrb[0].mxu0 %v1506
          %v2357 = vpop.f32.mrb[0].mxu0
          %v2358 = vadd.f32 %v2133, %v2357
          %v2359 = vpop.f32.mrb[0].mxu0
          %2360 = vmatprep.mubr.f32.mxu0 0.0
          %2361 = vmatmul.mubr.f32.gmra.mrb[0].mxu0 %v1507
          %v2362 = vpop.f32.mrb[0].mxu0
          %v2363 = vadd.f32 %v2138, %v2362
          %v2364 = vpop.f32.mrb[0].mxu0
          %2365 = vmatprep.mubr.f32.mxu0 0.0
          %2366 = vmatmul.mubr.f32.gmra.mrb[0].mxu0 %v1508
          %v2367 = vpop.f32.mrb[0].mxu0
          %v2368 = vadd.f32 %v2143, %v2367
          %v2369 = vpop.f32.mrb[0].mxu0
          %2370 = vmatprep.mubr.f32.mxu0 0.0
          %2371 = vmatmul.mubr.f32.gmra.mrb[0].mxu0 %v1509
          %v2372 = vpop.f32.mrb[0].mxu0
          %v2373 = vadd.f32 %v2148, %v2372
          %v2374 = vpop.f32.mrb[0].mxu0
          %2375 = vdwg.mxu0
          %v2376 = vmax.f32 %v2218, 0.0
          %v2377 = vmax.f32 %v2223, 0.0
          %v2378 = vmax.f32 %v2228, 0.0
          %v2379 = vmax.f32 %v2233, 0.0
          %v2380 = vmax.f32 %v2238, 0.0
          %v2381 = vmax.f32 %v2243, 0.0
          %v2382 = vmax.f32 %v2248, 0.0
          %v2383 = vmax.f32 %v2253, 0.0
          %v2384 = vmax.f32 %v2258, 0.0
          %v2385 = vmax.f32 %v2263, 0.0
          %v2386 = vmax.f32 %v2268, 0.0
          %v2387 = vmax.f32 %v2273, 0.0
          %v2388 = vmax.f32 %v2278, 0.0
          %v2389 = vmax.f32 %v2283, 0.0
          %v2390 = vmax.f32 %v2288, 0.0
          %v2391 = vmax.f32 %v2293, 0.0
          %v2392 = vmax.f32 %v2298, 0.0
          %v2393 = vmax.f32 %v2303, 0.0
          %v2394 = vmax.f32 %v2308, 0.0
          %v2395 = vmax.f32 %v2313, 0.0
          %v2396 = vmax.f32 %v2318, 0.0
          %v2397 = vmax.f32 %v2323, 0.0
          %v2398 = vmax.f32 %v2328, 0.0
          %v2399 = vmax.f32 %v2333, 0.0
          %v2400 = vmax.f32 %v2338, 0.0
          %v2401 = vmax.f32 %v2343, 0.0
          %v2402 = vmax.f32 %v2348, 0.0
          %v2403 = vmax.f32 %v2353, 0.0
          %v2404 = vmax.f32 %v2358, 0.0
          %v2405 = vmax.f32 %v2363, 0.0
          %v2406 = vmax.f32 %v2368, 0.0
          %v2407 = vmax.f32 %v2373, 0.0
          %v2408 = vmul.f32 %v2376, %v2376
          %v2409 = vmul.f32 %v2377, %v2377
          %v2410 = vmul.f32 %v2378, %v2378
          %v2411 = vmul.f32 %v2379, %v2379
          %v2412 = vmul.f32 %v2380, %v2380
          %v2413 = vmul.f32 %v2381, %v2381
          %v2414 = vmul.f32 %v2382, %v2382
          %v2415 = vmul.f32 %v2383, %v2383
          %v2416 = vmul.f32 %v2384, %v2384
          %v2417 = vmul.f32 %v2385, %v2385
          %v2418 = vmul.f32 %v2386, %v2386
          %v2419 = vmul.f32 %v2387, %v2387
          %v2420 = vmul.f32 %v2388, %v2388
          %v2421 = vmul.f32 %v2389, %v2389
          %v2422 = vmul.f32 %v2390, %v2390
          %v2423 = vmul.f32 %v2391, %v2391
          %v2424 = vmul.f32 %v2392, %v2392
          %v2425 = vmul.f32 %v2393, %v2393
          %v2426 = vmul.f32 %v2394, %v2394
          %v2427 = vmul.f32 %v2395, %v2395
          %v2428 = vmul.f32 %v2396, %v2396
          %v2429 = vmul.f32 %v2397, %v2397
          %v2430 = vmul.f32 %v2398, %v2398
          %v2431 = vmul.f32 %v2399, %v2399
          %v2432 = vmul.f32 %v2400, %v2400
          %v2433 = vmul.f32 %v2401, %v2401
          %v2434 = vmul.f32 %v2402, %v2402
          %v2435 = vmul.f32 %v2403, %v2403
          %v2436 = vmul.f32 %v2404, %v2404
          %v2437 = vmul.f32 %v2405, %v2405
          %v2438 = vmul.f32 %v2406, %v2406
          %v2439 = vmul.f32 %v2407, %v2407
          %2440 = vadd.xlane.f32.xlu0 %v2408
          %v2441 = vpop.xlane.xlu0 %2440
          %2442 = vadd.xlane.f32.xlu0 %v2409
          %v2443 = vpop.xlane.xlu0 %2442
          %2444 = vadd.xlane.f32.xlu0 %v2410
          %v2445 = vpop.xlane.xlu0 %2444
          %2446 = vadd.xlane.f32.xlu0 %v2411
          %v2447 = vpop.xlane.xlu0 %2446
          %2448 = vadd.xlane.f32.xlu0 %v2412
          %v2449 = vpop.xlane.xlu0 %2448
          %2450 = vadd.xlane.f32.xlu0 %v2413
          %v2451 = vpop.xlane.xlu0 %2450
          %2452 = vadd.xlane.f32.xlu0 %v2414
          %v2453 = vpop.xlane.xlu0 %2452
          %2454 = vadd.xlane.f32.xlu0 %v2415
          %v2455 = vpop.xlane.xlu0 %2454
          %2456 = vadd.xlane.f32.xlu0 %v2416
          %v2457 = vpop.xlane.xlu0 %2456
          %2458 = vadd.xlane.f32.xlu0 %v2417
          %v2459 = vpop.xlane.xlu0 %2458
          %2460 = vadd.xlane.f32.xlu0 %v2418
          %v2461 = vpop.xlane.xlu0 %2460
          %2462 = vadd.xlane.f32.xlu0 %v2419
          %v2463 = vpop.xlane.xlu0 %2462
          %2464 = vadd.xlane.f32.xlu0 %v2420
          %v2465 = vpop.xlane.xlu0 %2464
          %2466 = vadd.xlane.f32.xlu0 %v2421
          %v2467 = vpop.xlane.xlu0 %2466
          %2468 = vadd.xlane.f32.xlu0 %v2422
          %v2469 = vpop.xlane.xlu0 %2468
          %2470 = vadd.xlane.f32.xlu0 %v2423
          %v2471 = vpop.xlane.xlu0 %2470
          %2472 = vadd.xlane.f32.xlu0 %v2424
          %v2473 = vpop.xlane.xlu0 %2472
          %2474 = vadd.xlane.f32.xlu0 %v2425
          %v2475 = vpop.xlane.xlu0 %2474
          %2476 = vadd.xlane.f32.xlu0 %v2426
          %v2477 = vpop.xlane.xlu0 %2476
          %2478 = vadd.xlane.f32.xlu0 %v2427
          %v2479 = vpop.xlane.xlu0 %2478
          %2480 = vadd.xlane.f32.xlu0 %v2428
          %v2481 = vpop.xlane.xlu0 %2480
          %2482 = vadd.xlane.f32.xlu0 %v2429
          %v2483 = vpop.xlane.xlu0 %2482
          %2484 = vadd.xlane.f32.xlu0 %v2430
          %v2485 = vpop.xlane.xlu0 %2484
          %2486 = vadd.xlane.f32.xlu0 %v2431
          %v2487 = vpop.xlane.xlu0 %2486
          %2488 = vadd.xlane.f32.xlu0 %v2432
          %v2489 = vpop.xlane.xlu0 %2488
          %2490 = vadd.xlane.f32.xlu0 %v2433
          %v2491 = vpop.xlane.xlu0 %2490
          %2492 = vadd.xlane.f32.xlu0 %v2434
          %v2493 = vpop.xlane.xlu0 %2492
          %2494 = vadd.xlane.f32.xlu0 %v2435
          %v2495 = vpop.xlane.xlu0 %2494
          %2496 = vadd.xlane.f32.xlu0 %v2436
          %v2497 = vpop.xlane.xlu0 %2496
          %2498 = vadd.xlane.f32.xlu0 %v2437
          %v2499 = vpop.xlane.xlu0 %2498
          %2500 = vadd.xlane.f32.xlu0 %v2438
          %v2501 = vpop.xlane.xlu0 %2500
          %2502 = vadd.xlane.f32.xlu0 %v2439
          %v2503 = vpop.xlane.xlu0 %2502
          %v2504 = vmax.f32 %v2441, 1e-24
          %v2505 = vmax.f32 %v2443, 1e-24
          %v2506 = vmax.f32 %v2445, 1e-24
          %v2507 = vmax.f32 %v2447, 1e-24
          %v2508 = vmax.f32 %v2449, 1e-24
          %v2509 = vmax.f32 %v2451, 1e-24
          %v2510 = vmax.f32 %v2453, 1e-24
          %v2511 = vmax.f32 %v2455, 1e-24
          %v2512 = vmax.f32 %v2457, 1e-24
          %v2513 = vmax.f32 %v2459, 1e-24
          %v2514 = vmax.f32 %v2461, 1e-24
          %v2515 = vmax.f32 %v2463, 1e-24
          %v2516 = vmax.f32 %v2465, 1e-24
          %v2517 = vmax.f32 %v2467, 1e-24
          %v2518 = vmax.f32 %v2469, 1e-24
          %v2519 = vmax.f32 %v2471, 1e-24
          %v2520 = vmax.f32 %v2473, 1e-24
          %v2521 = vmax.f32 %v2475, 1e-24
          %v2522 = vmax.f32 %v2477, 1e-24
          %v2523 = vmax.f32 %v2479, 1e-24
          %v2524 = vmax.f32 %v2481, 1e-24
          %v2525 = vmax.f32 %v2483, 1e-24
          %v2526 = vmax.f32 %v2485, 1e-24
          %v2527 = vmax.f32 %v2487, 1e-24
          %v2528 = vmax.f32 %v2489, 1e-24
          %v2529 = vmax.f32 %v2491, 1e-24
          %v2530 = vmax.f32 %v2493, 1e-24
          %v2531 = vmax.f32 %v2495, 1e-24
          %v2532 = vmax.f32 %v2497, 1e-24
          %v2533 = vmax.f32 %v2499, 1e-24
          %v2534 = vmax.f32 %v2501, 1e-24
          %v2535 = vmax.f32 %v2503, 1e-24
          %v2536 = vrsqrt.pop %v2504
          %v2537 = vrsqrt.pop %v2505
          %v2538 = vrsqrt.pop %v2506
          %v2539 = vrsqrt.pop %v2507
          %v2540 = vrsqrt.pop %v2508
          %v2541 = vrsqrt.pop %v2509
          %v2542 = vrsqrt.pop %v2510
          %v2543 = vrsqrt.pop %v2511
          %v2544 = vrsqrt.pop %v2512
          %v2545 = vrsqrt.pop %v2513
          %v2546 = vrsqrt.pop %v2514
          %v2547 = vrsqrt.pop %v2515
          %v2548 = vrsqrt.pop %v2516
          %v2549 = vrsqrt.pop %v2517
          %v2550 = vrsqrt.pop %v2518
          %v2551 = vrsqrt.pop %v2519
          %v2552 = vrsqrt.pop %v2520
          %v2553 = vrsqrt.pop %v2521
          %v2554 = vrsqrt.pop %v2522
          %v2555 = vrsqrt.pop %v2523
          %v2556 = vrsqrt.pop %v2524
          %v2557 = vrsqrt.pop %v2525
          %v2558 = vrsqrt.pop %v2526
          %v2559 = vrsqrt.pop %v2527
          %v2560 = vrsqrt.pop %v2528
          %v2561 = vrsqrt.pop %v2529
          %v2562 = vrsqrt.pop %v2530
          %v2563 = vrsqrt.pop %v2531
          %v2564 = vrsqrt.pop %v2532
          %v2565 = vrsqrt.pop %v2533
          %v2566 = vrsqrt.pop %v2534
          %v2567 = vrsqrt.pop %v2535
          %v2568 = vmul.f32 %v2376, %v2536
          %v2569 = vmul.f32 %v2377, %v2537
          %v2570 = vmul.f32 %v2378, %v2538
          %v2571 = vmul.f32 %v2379, %v2539
          %v2572 = vmul.f32 %v2380, %v2540
          %v2573 = vmul.f32 %v2381, %v2541
          %v2574 = vmul.f32 %v2382, %v2542
          %v2575 = vmul.f32 %v2383, %v2543
          %v2576 = vmul.f32 %v2384, %v2544
          %v2577 = vmul.f32 %v2385, %v2545
          %v2578 = vmul.f32 %v2386, %v2546
          %v2579 = vmul.f32 %v2387, %v2547
          %v2580 = vmul.f32 %v2388, %v2548
          %v2581 = vmul.f32 %v2389, %v2549
          %v2582 = vmul.f32 %v2390, %v2550
          %v2583 = vmul.f32 %v2391, %v2551
          %v2584 = vmul.f32 %v2392, %v2552
          %v2585 = vmul.f32 %v2393, %v2553
          %v2586 = vmul.f32 %v2394, %v2554
          %v2587 = vmul.f32 %v2395, %v2555
          %v2588 = vmul.f32 %v2396, %v2556
          %v2589 = vmul.f32 %v2397, %v2557
          %v2590 = vmul.f32 %v2398, %v2558
          %v2591 = vmul.f32 %v2399, %v2559
          %v2592 = vmul.f32 %v2400, %v2560
          %v2593 = vmul.f32 %v2401, %v2561
          %v2594 = vmul.f32 %v2402, %v2562
          %v2595 = vmul.f32 %v2403, %v2563
          %v2596 = vmul.f32 %v2404, %v2564
          %v2597 = vmul.f32 %v2405, %v2565
          %v2598 = vmul.f32 %v2406, %v2566
          %v2599 = vmul.f32 %v2407, %v2567
          %2600 = vst [vmem:[%s340] sm:$0xff] %v2568
          %2601 = vst [vmem:[%s340 + $0x8] sm:$0xff] %v2569
          %2602 = vst [vmem:[%s340 + $0x10] sm:$0xff] %v2570
          %2603 = vst [vmem:[%s340 + $0x18] sm:$0xff] %v2571
          %2604 = vst [vmem:[%s340 + $0x20] sm:$0xff] %v2572
          %2605 = vst [vmem:[%s340 + $0x28] sm:$0xff] %v2573
          %2606 = vst [vmem:[%s340 + $0x30] sm:$0xff] %v2574
          %2607 = vst [vmem:[%s340 + $0x38] sm:$0xff] %v2575
          %2608 = vst [vmem:[%s340 + $0x40] sm:$0xff] %v2576
          %2609 = vst [vmem:[%s340 + $0x48] sm:$0xff] %v2577
          %2610 = vst [vmem:[%s340 + $0x50] sm:$0xff] %v2578
          %2611 = vst [vmem:[%s340 + $0x58] sm:$0xff] %v2579
          %2612 = vst [vmem:[%s340 + $0x60] sm:$0xff] %v2580
          %2613 = vst [vmem:[%s340 + $0x68] sm:$0xff] %v2581
          %2614 = vst [vmem:[%s340 + $0x70] sm:$0xff] %v2582
          %2615 = vst [vmem:[%s340 + $0x78] sm:$0xff] %v2583
          %2616 = vst [vmem:[%s340 + $0x80] sm:$0xff] %v2584
          %2617 = vst [vmem:[%s340 + $0x88] sm:$0xff] %v2585
          %2618 = vst [vmem:[%s340 + $0x90] sm:$0xff] %v2586
          %2619 = vst [vmem:[%s340 + $0x98] sm:$0xff] %v2587
          %2620 = vst [vmem:[%s340 + $0xa0] sm:$0xff] %v2588
          %2621 = vst [vmem:[%s340 + $0xa8] sm:$0xff] %v2589
          %2622 = vst [vmem:[%s340 + $0xb0] sm:$0xff] %v2590
          %2623 = vst [vmem:[%s340 + $0xb8] sm:$0xff] %v2591
          %2624 = vst [vmem:[%s340 + $0xc0] sm:$0xff] %v2592
          %2625 = vst [vmem:[%s340 + $0xc8] sm:$0xff] %v2593
          %2626 = vst [vmem:[%s340 + $0xd0] sm:$0xff] %v2594
          %2627 = vst [vmem:[%s340 + $0xd8] sm:$0xff] %v2595
          %2628 = vst [vmem:[%s340 + $0xe0] sm:$0xff] %v2596
          %2629 = vst [vmem:[%s340 + $0xe8] sm:$0xff] %v2597
          %2630 = vst [vmem:[%s340 + $0xf0] sm:$0xff] %v2598
          %2631 = vst [vmem:[%s340 + $0xf8] sm:$0xff] %v2599
        $region68: #{tpu_custom_call.1} parent=39 // pred_fallthru
          _
        %s2632 = sand.u32 %s161, 1
        %s2633 = scalar_lea.sflag [#allocation6], %s2632
        %s2634 = sand.u32 %s161, 1
        %s2635 = smul.addr %s2634, 256
        %s2636 = scalar_lea.vmem [#allocation13], %s2635
        // Predicated region
        $region69: #{tpu_custom_call.1} parent=39 // pred_check
          %p2637 = pneg %p171
        $region70: #{tpu_custom_call.1} parent=39 // pred_check_branch
          %2639 = sbr.rel (%p2637) target = $region72
        $region71: #{tpu_custom_call.1} parent=39 // pred_region
          %s2640 = smul.u32 32, %s28
          %s2642 = ssub.s32 4096, 4096
          %2643 = vsyncadd %s2633, %s2642
          %s2644 = smul.addr %s2640, 128
          %s2645 = scalar_lea.hbm %s5, %s2644
          %s2646 = sshll.u32 %s2636, 4
          %s2647 = int_to_ptr.vmem [resolvable:$true] %s2646
          %2652 = dma.vmem_to_hbm [thread:$0]  %s2647, 4096, %s2645, %s2633, 128, 128, 8
        $region72: #{tpu_custom_call.1} parent=39 // pred_fallthru
          _
      $region40: #{tpu_custom_call.1} parent=5 // pred_fallthru
        _
      %p2653 = scmp.le.s32.totalorder 2, %s19
      // Predicated region
      $region73: #{tpu_custom_call.1} parent=5 // pred_check
        %p2654 = pneg %p2653
      $region74: #{tpu_custom_call.1} parent=5 // pred_check_branch
        %2656 = sbr.rel (%p2654) target = $region76
      $region75: #{tpu_custom_call.1} parent=5 // pred_region
        %s2657 = ssub.s32 %s19, 2
        // Predicated region
        $region77: #{tpu_custom_call.1} parent=75 // pred_check
          %p2658 = pneg %p177
        $region78: #{tpu_custom_call.1} parent=75 // pred_check_branch
          %2660 = sbr.rel (%p2658) target = $region80
        $region79: #{tpu_custom_call.1} parent=75 // pred_region
          %s2661 = sand.u32 %s162, 1
          %s2662 = scalar_lea.sflag [#allocation6], %s2661
          %s2663 = sand.u32 %s162, 1
          %s2664 = smul.addr %s2663, 256
          %s2665 = scalar_lea.vmem [#allocation13], %s2664
          %2666 = dma.done %s2662, 4096
        $region80: #{tpu_custom_call.1} parent=75 // pred_fallthru
          _
      $region76: #{tpu_custom_call.1} parent=5 // pred_fallthru
        _
    $region6: #{tpu_custom_call.1} parent=1 // loop_footer
      %s23 = sadd.s32 1, %s19
    $region7: #{tpu_custom_call.1} parent=1 // loop_footer_branch
      %18 = sbr.rel target = $region3
    $region8: #{tpu_custom_call.1} parent=1 // loop_exit
      _
    %2667 = vsyncpa [#allocation5], 1
    %s2668 = scalar_lea.sflag [#allocation5], 1
    %2669 = vsyncpa %s2668, 1
    %2670 = vsyncpa [#allocation8], 1
    %2671 = vsyncpa [#allocation12], 1
    %2672 = vsyncpa [#allocation6], 1
    %s2673 = scalar_lea.sflag [#allocation6], 1
    %2674 = vsyncpa %s2673, 1

</llo_original>
